<compile_context>
chip_gen: v7x
topology: tpu7x:2x2x1
jax: 0.10.0
libtpu: 0.0.40
codegen_flags: <defaults>
</compile_context>

<pallas_src>
import jax
import jax.numpy as jnp
import numpy as np
from jax.experimental import pallas as pl
from jax.experimental.pallas import tpu as pltpu


# ----------------------------- Fused Pallas kernel ------------------------------


def fused_wake_word_kernel(x_ref, w1_ref, b1_ref, w2_ref, b2_ref,
                           wfc1_ref, bfc1_ref, wfc2_ref, bfc2_ref, o_ref):
    """One batch element: conv1+pool1 -> conv2+pool2 -> fc1 -> fc2 -> sigmoid."""
    x = x_ref[0]                               # (3*C_in, T) im2col'd input (pre-padded)
    t_len = x.shape[1]
    l1 = (t_len - 3) // 2 + 1
    l2 = (l1 - 3) // 2 + 1
    c_out = w1_ref.shape[0]

    # ---- Conv1 (BN folded into weights/bias) + ReLU: single (64, 3*C_in)@(3*C_in, T) ----
    y = jnp.dot(w1_ref[...], x, preferred_element_type=jnp.float32)          # (64, T)
    y = jnp.maximum(y + b1_ref[...], 0.0)

    # ---- MaxPool1d(k=3, s=2): stride-1 window max, then stride-2 selection matmul ----
    f1 = jnp.maximum(jnp.maximum(y[:, :t_len - 2], y[:, 1:t_len - 1]), y[:, 2:t_len])
    rr = jax.lax.broadcasted_iota(jnp.int32, (t_len - 2, l1), 0)
    cc = jax.lax.broadcasted_iota(jnp.int32, (t_len - 2, l1), 1)
    sel1 = (rr == 2 * cc).astype(jnp.float32)                                 # in-kernel, no DMA
    p1 = jnp.dot(f1, sel1, preferred_element_type=jnp.float32)                # (64, L1)

    # ---- Conv2 (BN folded) + ReLU: stack 3 shifted views -> single (64,192)@(192,L1) ----
    zc = jnp.zeros((c_out, 1), jnp.float32)
    p1p = jnp.concatenate([zc, p1, zc], axis=1)                               # (64, L1+2)
    x2 = jnp.concatenate([p1p[:, 0:l1], p1p[:, 1:l1 + 1], p1p[:, 2:l1 + 2]], axis=0)
    y2 = jnp.dot(w2_ref[...], x2, preferred_element_type=jnp.float32)         # (64, L1)
    y2 = jnp.maximum(y2 + b2_ref[...], 0.0)
    f2 = jnp.maximum(jnp.maximum(y2[:, :l1 - 2], y2[:, 1:l1 - 1]), y2[:, 2:l1])   # (64, L1-2)

    # ---- FC1 fused with pool2's stride-2 selection ----
    # h[j] = sum_{c,t} f2[c, 2t] * wfc1[t, c, j]  (wfc1[t,c,j] == torch fc1_W[j, c*L2 + t])
    acc = f2[:, 0:1] * wfc1_ref[0]                                            # (64, 128)
    for t in range(1, l2):
        acc = acc + f2[:, 2 * t:2 * t + 1] * wfc1_ref[t]
    h = jnp.sum(acc, axis=0, keepdims=True) + bfc1_ref[...]                   # (1, 128)
    h = jnp.maximum(h, 0.0)

    # ---- FC2 + Sigmoid ----
    z = jnp.sum(h * wfc2_ref[...], axis=1, keepdims=True) + bfc2_ref[...]     # (1, 1)
    o_ref[0] = 1.0 / (1.0 + jnp.exp(-z))


# ------------------------------- Wrapper ------------------------------------


@jax.jit
def wake_word_forward(x, packed):
    (w1_mat, b1f, w2_mat, b2f, wfc1, bfc1, wfc2, bfc2) = packed
    B, C, T = x.shape

    # Layer-1 im2col done once in XLA (glue): (B, 3*C, T), row k*C+i <- padded x[i, t+k]
    xp = jnp.pad(x, ((0, 0), (0, 0), (1, 1)))
    x_col = jnp.concatenate([xp[:, :, k:k + T] for k in range(3)], axis=1)

    out = pl.pallas_call(
        fused_wake_word_kernel,
        out_shape=jax.ShapeDtypeStruct((B, 1, 1), jnp.float32),
        grid=(B,),
        in_specs=[
            pl.BlockSpec((1, 3 * C, T), lambda b: (b, 0, 0)),
            pl.BlockSpec(w1_mat.shape, lambda b: (0, 0)),
            pl.BlockSpec(b1f.shape, lambda b: (0, 0)),
            pl.BlockSpec(w2_mat.shape, lambda b: (0, 0)),
            pl.BlockSpec(b2f.shape, lambda b: (0, 0)),
            pl.BlockSpec(wfc1.shape, lambda b: (0, 0, 0)),
            pl.BlockSpec(bfc1.shape, lambda b: (0, 0)),
            pl.BlockSpec(wfc2.shape, lambda b: (0, 0)),
            pl.BlockSpec(bfc2.shape, lambda b: (0, 0)),
        ],
        out_specs=pl.BlockSpec((1, 1, 1), lambda b: (b, 0, 0)),
        compiler_params=pltpu.CompilerParams(dimension_semantics=("parallel",)),
    )(x_col, w1_mat, b1f, w2_mat, b2f, wfc1, bfc1, wfc2, bfc2)
    return out.reshape(B, 1)


# ----------------------- Parameters (torch layout) + packing -----------------------


def make_raw_params(key, n_mfcc, num_frames):
    L1 = (num_frames - 3) // 2 + 1
    L2 = (L1 - 3) // 2 + 1
    fc_in = 64 * L2
    ks = jax.random.split(key, 16)

    w1 = jax.random.normal(ks[0], (64, n_mfcc, 3), jnp.float32) * 0.1
    b1 = jax.random.normal(ks[1], (64,), jnp.float32) * 0.1
    g1 = 1.0 + 0.1 * jax.random.normal(ks[2], (64,), jnp.float32)
    be1 = 0.1 * jax.random.normal(ks[3], (64,), jnp.float32)
    m1 = 0.1 * jax.random.normal(ks[4], (64,), jnp.float32)
    v1 = jax.random.uniform(ks[5], (64,), jnp.float32, minval=0.5, maxval=1.5)

    w2 = jax.random.normal(ks[6], (64, 64, 3), jnp.float32) * 0.05
    b2 = jax.random.normal(ks[7], (64,), jnp.float32) * 0.1
    g2 = 1.0 + 0.1 * jax.random.normal(ks[8], (64,), jnp.float32)
    be2 = 0.1 * jax.random.normal(ks[9], (64,), jnp.float32)
    m2 = 0.1 * jax.random.normal(ks[10], (64,), jnp.float32)
    v2 = jax.random.uniform(ks[11], (64,), jnp.float32, minval=0.5, maxval=1.5)

    fc1_w = jax.random.normal(ks[12], (128, fc_in), jnp.float32) * 0.02
    fc1_b = jax.random.normal(ks[13], (128,), jnp.float32) * 0.1
    fc2_w = jax.random.normal(ks[14], (1, 128), jnp.float32) * 0.1
    fc2_b = jax.random.normal(ks[15], (1,), jnp.float32) * 0.1

    return (w1, b1, g1, be1, m1, v1, w2, b2, g2, be2, m2, v2, fc1_w, fc1_b, fc2_w, fc2_b)


def pack_params(raw, n_mfcc, num_frames, eps=1e-5):
    (w1, b1, g1, be1, m1, v1, w2, b2, g2, be2, m2, v2, fc1_w, fc1_b, fc2_w, fc2_b) = raw
    L1 = (num_frames - 3) // 2 + 1
    L2 = (L1 - 3) // 2 + 1

    # Fold eval-mode BN (and conv bias) into the conv weights: W' = s*W, b' = s*(b-m)+beta
    s1 = g1 / jnp.sqrt(v1 + eps)
    s2 = g2 / jnp.sqrt(v2 + eps)
    w1f = w1 * s1[:, None, None]
    b1f = (s1 * (b1 - m1) + be1).reshape(64, 1)
    w2f = w2 * s2[:, None, None]
    b2f = (s2 * (b2 - m2) + be2).reshape(64, 1)

    # im2col weight layout: [o, k*C_in + i] = W[o, i, k]
    w1_mat = jnp.transpose(w1f, (0, 2, 1)).reshape(64, 3 * n_mfcc)
    w2_mat = jnp.transpose(w2f, (0, 2, 1)).reshape(64, 3 * 64)

    # FC1 repack matching torch's view(B,-1) flatten: wfc1[t, c, j] = fc1_w[j, c*L2 + t]
    wfc1 = jnp.transpose(fc1_w.reshape(128, 64, L2), (2, 1, 0))
    bfc1 = fc1_b.reshape(1, 128)
    wfc2 = fc2_w.reshape(1, 128)
    bfc2 = fc2_b.reshape(1, 1)

    return (w1_mat, b1f, w2_mat, b2f, wfc1, bfc1, wfc2, bfc2)


# ------------------------------ Pure-JAX reference ---------------------------


def ref_forward(x, raw, eps=1e-5):
    (w1, b1, g1, be1, m1, v1, w2, b2, g2, be2, m2, v2, fc1_w, fc1_b, fc2_w, fc2_b) = raw
    hp = jax.lax.Precision.HIGHEST

    def conv1d(xi, w, b):
        c_in, tl = xi.shape
        xp = jnp.pad(xi, ((0, 0), (1, 1)))
        return sum(jnp.dot(w[:, :, k], xp[:, k:k + tl], precision=hp) for k in range(3)) + b[:, None]

    def bn_eval(y, g, be, m, v):
        return (y - m[:, None]) / jnp.sqrt(v[:, None] + eps) * g[:, None] + be[:, None]

    def maxpool3s2(y):
        f = jnp.maximum(jnp.maximum(y[:, :-2], y[:, 1:-1]), y[:, 2:])
        return f[:, ::2]

    outs = []
    for i in range(x.shape[0]):
        h = jnp.maximum(bn_eval(conv1d(x[i], w1, b1), g1, be1, m1, v1), 0.0)
        h = maxpool3s2(h)
        h = jnp.maximum(bn_eval(conv1d(h, w2, b2), g2, be2, m2, v2), 0.0)
        h = maxpool3s2(h)
        flat = h.reshape(1, -1)                          # torch view(B,-1): row-major over (C, T)
        z = jnp.maximum(jnp.dot(flat, fc1_w.T, precision=hp) + fc1_b[None, :], 0.0)
        z = jnp.dot(z, fc2_w.T, precision=hp) + fc2_b[None, :]
        outs.append(1.0 / (1.0 + jnp.exp(-z)))
    return jnp.concatenate(outs, axis=0)


# --------------------------------- Main --------------------------------------


if __name__ == "__main__":
    B, n_mfcc, num_frames = 2, 13, 101   # WakeWordModel defaults
    key = jax.random.PRNGKey(0)
    kx, kp = jax.random.split(key)
    x = jax.random.normal(kx, (B, n_mfcc, num_frames), jnp.float32)

    raw = make_raw_params(kp, n_mfcc, num_frames)
    packed = pack_params(raw, n_mfcc, num_frames)

    out = wake_word_forward(x, packed)
    out = jax.block_until_ready(out)

    ref = jax.block_until_ready(ref_forward(x, raw))
    np.testing.assert_allclose(np.asarray(out), np.asarray(ref), rtol=1e-3, atol=1e-3)
    assert out.shape == (B, 1)

    print("KERNEL_OK")
</pallas_src>

<mosaic_0001>
module attributes {stable_mosaic.version = 11 : i64} {
  func.func @fused_wake_word_kernel(%arg0: i32, %arg1: memref<1x39x101xf32, #tpu.memory_space<vmem>>, %arg2: memref<64x39xf32, #tpu.memory_space<vmem>>, %arg3: memref<64x1xf32, #tpu.memory_space<vmem>>, %arg4: memref<64x192xf32, #tpu.memory_space<vmem>>, %arg5: memref<64x1xf32, #tpu.memory_space<vmem>>, %arg6: memref<24x64x128xf32, #tpu.memory_space<vmem>>, %arg7: memref<1x128xf32, #tpu.memory_space<vmem>>, %arg8: memref<1x128xf32, #tpu.memory_space<vmem>>, %arg9: memref<1x1xf32, #tpu.memory_space<vmem>>, %arg10: memref<1x1x1xf32, #tpu.memory_space<vmem>>) attributes {dimension_semantics = [#tpu.dimension_semantics<parallel>], iteration_bounds = array<i64: 2>, scalar_prefetch = 0 : i64, scratch_operands = 0 : i64, tpu.core_type = #tpu.core_type<tc>, window_params = [{transform_indices = @transform_0, window_bounds = array<i64: 1, 39, 101>}, {pipeline_mode = #tpu.pipeline_mode<synchronous>, transform_indices = @transform_1, window_bounds = array<i64: 64, 39>}, {pipeline_mode = #tpu.pipeline_mode<synchronous>, transform_indices = @transform_2, window_bounds = array<i64: 64, 1>}, {pipeline_mode = #tpu.pipeline_mode<synchronous>, transform_indices = @transform_3, window_bounds = array<i64: 64, 192>}, {pipeline_mode = #tpu.pipeline_mode<synchronous>, transform_indices = @transform_4, window_bounds = array<i64: 64, 1>}, {pipeline_mode = #tpu.pipeline_mode<synchronous>, transform_indices = @transform_5, window_bounds = array<i64: 24, 64, 128>}, {pipeline_mode = #tpu.pipeline_mode<synchronous>, transform_indices = @transform_6, window_bounds = array<i64: 1, 128>}, {pipeline_mode = #tpu.pipeline_mode<synchronous>, transform_indices = @transform_7, window_bounds = array<i64: 1, 128>}, {pipeline_mode = #tpu.pipeline_mode<synchronous>, transform_indices = @transform_8, window_bounds = array<i64: 1, 1>}, {transform_indices = @transform_9, window_bounds = array<i64: 1, 1, 1>}]} {
    %c0 = arith.constant 0 : index
    %c0_0 = arith.constant 0 : index
    %c0_1 = arith.constant 0 : index
    %0 = vector.load %arg1[%c0, %c0_0, %c0_1] : memref<1x39x101xf32, #tpu.memory_space<vmem>>, vector<1x39x101xf32>
    %1 = vector.shape_cast %0 : vector<1x39x101xf32> to vector<39x101xf32>
    %c0_2 = arith.constant 0 : index
    %c0_3 = arith.constant 0 : index
    %2 = vector.load %arg2[%c0_2, %c0_3] : memref<64x39xf32, #tpu.memory_space<vmem>>, vector<64x39xf32>
    %cst = arith.constant dense<0.000000e+00> : vector<64x101xf32>
    %3 = tpu.matmul %2, %1, %cst {dimension_numbers = #tpu.dot_dimension_numbers<[1], [0], [0], [1], [0, 0, 1, 1], [], []>} : vector<64x39xf32>, vector<39x101xf32>, vector<64x101xf32> -> vector<64x101xf32>
    %c0_4 = arith.constant 0 : index
    %c0_5 = arith.constant 0 : index
    %4 = vector.load %arg3[%c0_4, %c0_5] : memref<64x1xf32, #tpu.memory_space<vmem>>, vector<64x1xf32>
    %5 = vector.broadcast %4 : vector<64x1xf32> to vector<64x101xf32>
    %6 = arith.addf %3, %5 : vector<64x101xf32>
    %cst_6 = arith.constant 0.000000e+00 : f32
    %7 = vector.broadcast %cst_6 : f32 to vector<64x101xf32>
    %8 = arith.maximumf %6, %7 : vector<64x101xf32>
    %9 = vector.extract_strided_slice %8 {offsets = [0, 0], sizes = [64, 99], strides = [1, 1]} : vector<64x101xf32> to vector<64x99xf32>
    %10 = vector.extract_strided_slice %8 {offsets = [0, 1], sizes = [64, 99], strides = [1, 1]} : vector<64x101xf32> to vector<64x99xf32>
    %11 = arith.maximumf %9, %10 : vector<64x99xf32>
    %12 = vector.extract_strided_slice %8 {offsets = [0, 2], sizes = [64, 99], strides = [1, 1]} : vector<64x101xf32> to vector<64x99xf32>
    %13 = arith.maximumf %11, %12 : vector<64x99xf32>
    %14 = tpu.iota {dimensions = array<i32: 0>} : vector<99x50xi32>
    %15 = tpu.iota {dimensions = array<i32: 1>} : vector<99x50xi32>
    %c2_i32 = arith.constant 2 : i32
    %16 = vector.broadcast %c2_i32 : i32 to vector<99x50xi32>
    %17 = arith.muli %16, %15 : vector<99x50xi32>
    %18 = arith.cmpi eq, %14, %17 : vector<99x50xi32>
    %19 = arith.extui %18 : vector<99x50xi1> to vector<99x50xi32>
    %20 = arith.sitofp %19 : vector<99x50xi32> to vector<99x50xf32>
    %cst_7 = arith.constant dense<0.000000e+00> : vector<64x50xf32>
    %21 = tpu.matmul %13, %20, %cst_7 {dimension_numbers = #tpu.dot_dimension_numbers<[1], [0], [0], [1], [0, 0, 1, 1], [], []>} : vector<64x99xf32>, vector<99x50xf32>, vector<64x50xf32> -> vector<64x50xf32>
    %cst_8 = arith.constant 0.000000e+00 : f32
    %22 = vector.broadcast %cst_8 : f32 to vector<64x1xf32>
    %23 = tpu.concatenate %22, %21, %22 in 1 : vector<64x1xf32>, vector<64x50xf32>, vector<64x1xf32> -> vector<64x52xf32>
    %24 = vector.extract_strided_slice %23 {offsets = [0, 0], sizes = [64, 50], strides = [1, 1]} : vector<64x52xf32> to vector<64x50xf32>
    %25 = vector.extract_strided_slice %23 {offsets = [0, 1], sizes = [64, 50], strides = [1, 1]} : vector<64x52xf32> to vector<64x50xf32>
    %26 = vector.extract_strided_slice %23 {offsets = [0, 2], sizes = [64, 50], strides = [1, 1]} : vector<64x52xf32> to vector<64x50xf32>
    %27 = tpu.concatenate %24, %25, %26 in 0 : vector<64x50xf32>, vector<64x50xf32>, vector<64x50xf32> -> vector<192x50xf32>
    %c0_9 = arith.constant 0 : index
    %c0_10 = arith.constant 0 : index
    %28 = vector.load %arg4[%c0_9, %c0_10] : memref<64x192xf32, #tpu.memory_space<vmem>>, vector<64x192xf32>
    %cst_11 = arith.constant dense<0.000000e+00> : vector<64x50xf32>
    %29 = tpu.matmul %28, %27, %cst_11 {dimension_numbers = #tpu.dot_dimension_numbers<[1], [0], [0], [1], [0, 0, 1, 1], [], []>} : vector<64x192xf32>, vector<192x50xf32>, vector<64x50xf32> -> vector<64x50xf32>
    %c0_12 = arith.constant 0 : index
    %c0_13 = arith.constant 0 : index
    %30 = vector.load %arg5[%c0_12, %c0_13] : memref<64x1xf32, #tpu.memory_space<vmem>>, vector<64x1xf32>
    %31 = vector.broadcast %30 : vector<64x1xf32> to vector<64x50xf32>
    %32 = arith.addf %29, %31 : vector<64x50xf32>
    %cst_14 = arith.constant 0.000000e+00 : f32
    %33 = vector.broadcast %cst_14 : f32 to vector<64x50xf32>
    %34 = arith.maximumf %32, %33 : vector<64x50xf32>
    %35 = vector.extract_strided_slice %34 {offsets = [0, 0], sizes = [64, 48], strides = [1, 1]} : vector<64x50xf32> to vector<64x48xf32>
    %36 = vector.extract_strided_slice %34 {offsets = [0, 1], sizes = [64, 48], strides = [1, 1]} : vector<64x50xf32> to vector<64x48xf32>
    %37 = arith.maximumf %35, %36 : vector<64x48xf32>
    %38 = vector.extract_strided_slice %34 {offsets = [0, 2], sizes = [64, 48], strides = [1, 1]} : vector<64x50xf32> to vector<64x48xf32>
    %39 = arith.maximumf %37, %38 : vector<64x48xf32>
    %40 = vector.extract_strided_slice %39 {offsets = [0, 0], sizes = [64, 1], strides = [1, 1]} : vector<64x48xf32> to vector<64x1xf32>
    %c0_15 = arith.constant 0 : index
    %c0_16 = arith.constant 0 : index
    %c0_17 = arith.constant 0 : index
    %41 = vector.load %arg6[%c0_15, %c0_16, %c0_17] : memref<24x64x128xf32, #tpu.memory_space<vmem>>, vector<1x64x128xf32>
    %42 = vector.shape_cast %41 : vector<1x64x128xf32> to vector<64x128xf32>
    %43 = vector.broadcast %40 : vector<64x1xf32> to vector<64x128xf32>
    %44 = arith.mulf %43, %42 : vector<64x128xf32>
    %45 = vector.extract_strided_slice %39 {offsets = [0, 2], sizes = [64, 1], strides = [1, 1]} : vector<64x48xf32> to vector<64x1xf32>
    %c1 = arith.constant 1 : index
    %c0_18 = arith.constant 0 : index
    %c0_19 = arith.constant 0 : index
    %46 = vector.load %arg6[%c1, %c0_18, %c0_19] : memref<24x64x128xf32, #tpu.memory_space<vmem>>, vector<1x64x128xf32>
    %47 = vector.shape_cast %46 : vector<1x64x128xf32> to vector<64x128xf32>
    %48 = vector.broadcast %45 : vector<64x1xf32> to vector<64x128xf32>
    %49 = arith.mulf %48, %47 : vector<64x128xf32>
    %50 = arith.addf %44, %49 : vector<64x128xf32>
    %51 = vector.extract_strided_slice %39 {offsets = [0, 4], sizes = [64, 1], strides = [1, 1]} : vector<64x48xf32> to vector<64x1xf32>
    %c2 = arith.constant 2 : index
    %c0_20 = arith.constant 0 : index
    %c0_21 = arith.constant 0 : index
    %52 = vector.load %arg6[%c2, %c0_20, %c0_21] : memref<24x64x128xf32, #tpu.memory_space<vmem>>, vector<1x64x128xf32>
    %53 = vector.shape_cast %52 : vector<1x64x128xf32> to vector<64x128xf32>
    %54 = vector.broadcast %51 : vector<64x1xf32> to vector<64x128xf32>
    %55 = arith.mulf %54, %53 : vector<64x128xf32>
    %56 = arith.addf %50, %55 : vector<64x128xf32>
    %57 = vector.extract_strided_slice %39 {offsets = [0, 6], sizes = [64, 1], strides = [1, 1]} : vector<64x48xf32> to vector<64x1xf32>
    %c3 = arith.constant 3 : index
    %c0_22 = arith.constant 0 : index
    %c0_23 = arith.constant 0 : index
    %58 = vector.load %arg6[%c3, %c0_22, %c0_23] : memref<24x64x128xf32, #tpu.memory_space<vmem>>, vector<1x64x128xf32>
    %59 = vector.shape_cast %58 : vector<1x64x128xf32> to vector<64x128xf32>
    %60 = vector.broadcast %57 : vector<64x1xf32> to vector<64x128xf32>
    %61 = arith.mulf %60, %59 : vector<64x128xf32>
    %62 = arith.addf %56, %61 : vector<64x128xf32>
    %63 = vector.extract_strided_slice %39 {offsets = [0, 8], sizes = [64, 1], strides = [1, 1]} : vector<64x48xf32> to vector<64x1xf32>
    %c4 = arith.constant 4 : index
    %c0_24 = arith.constant 0 : index
    %c0_25 = arith.constant 0 : index
    %64 = vector.load %arg6[%c4, %c0_24, %c0_25] : memref<24x64x128xf32, #tpu.memory_space<vmem>>, vector<1x64x128xf32>
    %65 = vector.shape_cast %64 : vector<1x64x128xf32> to vector<64x128xf32>
    %66 = vector.broadcast %63 : vector<64x1xf32> to vector<64x128xf32>
    %67 = arith.mulf %66, %65 : vector<64x128xf32>
    %68 = arith.addf %62, %67 : vector<64x128xf32>
    %69 = vector.extract_strided_slice %39 {offsets = [0, 10], sizes = [64, 1], strides = [1, 1]} : vector<64x48xf32> to vector<64x1xf32>
    %c5 = arith.constant 5 : index
    %c0_26 = arith.constant 0 : index
    %c0_27 = arith.constant 0 : index
    %70 = vector.load %arg6[%c5, %c0_26, %c0_27] : memref<24x64x128xf32, #tpu.memory_space<vmem>>, vector<1x64x128xf32>
    %71 = vector.shape_cast %70 : vector<1x64x128xf32> to vector<64x128xf32>
    %72 = vector.broadcast %69 : vector<64x1xf32> to vector<64x128xf32>
    %73 = arith.mulf %72, %71 : vector<64x128xf32>
    %74 = arith.addf %68, %73 : vector<64x128xf32>
    %75 = vector.extract_strided_slice %39 {offsets = [0, 12], sizes = [64, 1], strides = [1, 1]} : vector<64x48xf32> to vector<64x1xf32>
    %c6 = arith.constant 6 : index
    %c0_28 = arith.constant 0 : index
    %c0_29 = arith.constant 0 : index
    %76 = vector.load %arg6[%c6, %c0_28, %c0_29] : memref<24x64x128xf32, #tpu.memory_space<vmem>>, vector<1x64x128xf32>
    %77 = vector.shape_cast %76 : vector<1x64x128xf32> to vector<64x128xf32>
    %78 = vector.broadcast %75 : vector<64x1xf32> to vector<64x128xf32>
    %79 = arith.mulf %78, %77 : vector<64x128xf32>
    %80 = arith.addf %74, %79 : vector<64x128xf32>
    %81 = vector.extract_strided_slice %39 {offsets = [0, 14], sizes = [64, 1], strides = [1, 1]} : vector<64x48xf32> to vector<64x1xf32>
    %c7 = arith.constant 7 : index
    %c0_30 = arith.constant 0 : index
    %c0_31 = arith.constant 0 : index
    %82 = vector.load %arg6[%c7, %c0_30, %c0_31] : memref<24x64x128xf32, #tpu.memory_space<vmem>>, vector<1x64x128xf32>
    %83 = vector.shape_cast %82 : vector<1x64x128xf32> to vector<64x128xf32>
    %84 = vector.broadcast %81 : vector<64x1xf32> to vector<64x128xf32>
    %85 = arith.mulf %84, %83 : vector<64x128xf32>
    %86 = arith.addf %80, %85 : vector<64x128xf32>
    %87 = vector.extract_strided_slice %39 {offsets = [0, 16], sizes = [64, 1], strides = [1, 1]} : vector<64x48xf32> to vector<64x1xf32>
    %c8 = arith.constant 8 : index
    %c0_32 = arith.constant 0 : index
    %c0_33 = arith.constant 0 : index
    %88 = vector.load %arg6[%c8, %c0_32, %c0_33] : memref<24x64x128xf32, #tpu.memory_space<vmem>>, vector<1x64x128xf32>
    %89 = vector.shape_cast %88 : vector<1x64x128xf32> to vector<64x128xf32>
    %90 = vector.broadcast %87 : vector<64x1xf32> to vector<64x128xf32>
    %91 = arith.mulf %90, %89 : vector<64x128xf32>
    %92 = arith.addf %86, %91 : vector<64x128xf32>
    %93 = vector.extract_strided_slice %39 {offsets = [0, 18], sizes = [64, 1], strides = [1, 1]} : vector<64x48xf32> to vector<64x1xf32>
    %c9 = arith.constant 9 : index
    %c0_34 = arith.constant 0 : index
    %c0_35 = arith.constant 0 : index
    %94 = vector.load %arg6[%c9, %c0_34, %c0_35] : memref<24x64x128xf32, #tpu.memory_space<vmem>>, vector<1x64x128xf32>
    %95 = vector.shape_cast %94 : vector<1x64x128xf32> to vector<64x128xf32>
    %96 = vector.broadcast %93 : vector<64x1xf32> to vector<64x128xf32>
    %97 = arith.mulf %96, %95 : vector<64x128xf32>
    %98 = arith.addf %92, %97 : vector<64x128xf32>
    %99 = vector.extract_strided_slice %39 {offsets = [0, 20], sizes = [64, 1], strides = [1, 1]} : vector<64x48xf32> to vector<64x1xf32>
    %c10 = arith.constant 10 : index
    %c0_36 = arith.constant 0 : index
    %c0_37 = arith.constant 0 : index
    %100 = vector.load %arg6[%c10, %c0_36, %c0_37] : memref<24x64x128xf32, #tpu.memory_space<vmem>>, vector<1x64x128xf32>
    %101 = vector.shape_cast %100 : vector<1x64x128xf32> to vector<64x128xf32>
    %102 = vector.broadcast %99 : vector<64x1xf32> to vector<64x128xf32>
    %103 = arith.mulf %102, %101 : vector<64x128xf32>
    %104 = arith.addf %98, %103 : vector<64x128xf32>
    %105 = vector.extract_strided_slice %39 {offsets = [0, 22], sizes = [64, 1], strides = [1, 1]} : vector<64x48xf32> to vector<64x1xf32>
    %c11 = arith.constant 11 : index
    %c0_38 = arith.constant 0 : index
    %c0_39 = arith.constant 0 : index
    %106 = vector.load %arg6[%c11, %c0_38, %c0_39] : memref<24x64x128xf32, #tpu.memory_space<vmem>>, vector<1x64x128xf32>
    %107 = vector.shape_cast %106 : vector<1x64x128xf32> to vector<64x128xf32>
    %108 = vector.broadcast %105 : vector<64x1xf32> to vector<64x128xf32>
    %109 = arith.mulf %108, %107 : vector<64x128xf32>
    %110 = arith.addf %104, %109 : vector<64x128xf32>
    %111 = vector.extract_strided_slice %39 {offsets = [0, 24], sizes = [64, 1], strides = [1, 1]} : vector<64x48xf32> to vector<64x1xf32>
    %c12 = arith.constant 12 : index
    %c0_40 = arith.constant 0 : index
    %c0_41 = arith.constant 0 : index
    %112 = vector.load %arg6[%c12, %c0_40, %c0_41] : memref<24x64x128xf32, #tpu.memory_space<vmem>>, vector<1x64x128xf32>
    %113 = vector.shape_cast %112 : vector<1x64x128xf32> to vector<64x128xf32>
    %114 = vector.broadcast %111 : vector<64x1xf32> to vector<64x128xf32>
    %115 = arith.mulf %114, %113 : vector<64x128xf32>
    %116 = arith.addf %110, %115 : vector<64x128xf32>
    %117 = vector.extract_strided_slice %39 {offsets = [0, 26], sizes = [64, 1], strides = [1, 1]} : vector<64x48xf32> to vector<64x1xf32>
    %c13 = arith.constant 13 : index
    %c0_42 = arith.constant 0 : index
    %c0_43 = arith.constant 0 : index
    %118 = vector.load %arg6[%c13, %c0_42, %c0_43] : memref<24x64x128xf32, #tpu.memory_space<vmem>>, vector<1x64x128xf32>
    %119 = vector.shape_cast %118 : vector<1x64x128xf32> to vector<64x128xf32>
    %120 = vector.broadcast %117 : vector<64x1xf32> to vector<64x128xf32>
    %121 = arith.mulf %120, %119 : vector<64x128xf32>
    %122 = arith.addf %116, %121 : vector<64x128xf32>
    %123 = vector.extract_strided_slice %39 {offsets = [0, 28], sizes = [64, 1], strides = [1, 1]} : vector<64x48xf32> to vector<64x1xf32>
    %c14 = arith.constant 14 : index
    %c0_44 = arith.constant 0 : index
    %c0_45 = arith.constant 0 : index
    %124 = vector.load %arg6[%c14, %c0_44, %c0_45] : memref<24x64x128xf32, #tpu.memory_space<vmem>>, vector<1x64x128xf32>
    %125 = vector.shape_cast %124 : vector<1x64x128xf32> to vector<64x128xf32>
    %126 = vector.broadcast %123 : vector<64x1xf32> to vector<64x128xf32>
    %127 = arith.mulf %126, %125 : vector<64x128xf32>
    %128 = arith.addf %122, %127 : vector<64x128xf32>
    %129 = vector.extract_strided_slice %39 {offsets = [0, 30], sizes = [64, 1], strides = [1, 1]} : vector<64x48xf32> to vector<64x1xf32>
    %c15 = arith.constant 15 : index
    %c0_46 = arith.constant 0 : index
    %c0_47 = arith.constant 0 : index
    %130 = vector.load %arg6[%c15, %c0_46, %c0_47] : memref<24x64x128xf32, #tpu.memory_space<vmem>>, vector<1x64x128xf32>
    %131 = vector.shape_cast %130 : vector<1x64x128xf32> to vector<64x128xf32>
    %132 = vector.broadcast %129 : vector<64x1xf32> to vector<64x128xf32>
    %133 = arith.mulf %132, %131 : vector<64x128xf32>
    %134 = arith.addf %128, %133 : vector<64x128xf32>
    %135 = vector.extract_strided_slice %39 {offsets = [0, 32], sizes = [64, 1], strides = [1, 1]} : vector<64x48xf32> to vector<64x1xf32>
    %c16 = arith.constant 16 : index
    %c0_48 = arith.constant 0 : index
    %c0_49 = arith.constant 0 : index
    %136 = vector.load %arg6[%c16, %c0_48, %c0_49] : memref<24x64x128xf32, #tpu.memory_space<vmem>>, vector<1x64x128xf32>
    %137 = vector.shape_cast %136 : vector<1x64x128xf32> to vector<64x128xf32>
    %138 = vector.broadcast %135 : vector<64x1xf32> to vector<64x128xf32>
    %139 = arith.mulf %138, %137 : vector<64x128xf32>
    %140 = arith.addf %134, %139 : vector<64x128xf32>
    %141 = vector.extract_strided_slice %39 {offsets = [0, 34], sizes = [64, 1], strides = [1, 1]} : vector<64x48xf32> to vector<64x1xf32>
    %c17 = arith.constant 17 : index
    %c0_50 = arith.constant 0 : index
    %c0_51 = arith.constant 0 : index
    %142 = vector.load %arg6[%c17, %c0_50, %c0_51] : memref<24x64x128xf32, #tpu.memory_space<vmem>>, vector<1x64x128xf32>
    %143 = vector.shape_cast %142 : vector<1x64x128xf32> to vector<64x128xf32>
    %144 = vector.broadcast %141 : vector<64x1xf32> to vector<64x128xf32>
    %145 = arith.mulf %144, %143 : vector<64x128xf32>
    %146 = arith.addf %140, %145 : vector<64x128xf32>
    %147 = vector.extract_strided_slice %39 {offsets = [0, 36], sizes = [64, 1], strides = [1, 1]} : vector<64x48xf32> to vector<64x1xf32>
    %c18 = arith.constant 18 : index
    %c0_52 = arith.constant 0 : index
    %c0_53 = arith.constant 0 : index
    %148 = vector.load %arg6[%c18, %c0_52, %c0_53] : memref<24x64x128xf32, #tpu.memory_space<vmem>>, vector<1x64x128xf32>
    %149 = vector.shape_cast %148 : vector<1x64x128xf32> to vector<64x128xf32>
    %150 = vector.broadcast %147 : vector<64x1xf32> to vector<64x128xf32>
    %151 = arith.mulf %150, %149 : vector<64x128xf32>
    %152 = arith.addf %146, %151 : vector<64x128xf32>
    %153 = vector.extract_strided_slice %39 {offsets = [0, 38], sizes = [64, 1], strides = [1, 1]} : vector<64x48xf32> to vector<64x1xf32>
    %c19 = arith.constant 19 : index
    %c0_54 = arith.constant 0 : index
    %c0_55 = arith.constant 0 : index
    %154 = vector.load %arg6[%c19, %c0_54, %c0_55] : memref<24x64x128xf32, #tpu.memory_space<vmem>>, vector<1x64x128xf32>
    %155 = vector.shape_cast %154 : vector<1x64x128xf32> to vector<64x128xf32>
    %156 = vector.broadcast %153 : vector<64x1xf32> to vector<64x128xf32>
    %157 = arith.mulf %156, %155 : vector<64x128xf32>
    %158 = arith.addf %152, %157 : vector<64x128xf32>
    %159 = vector.extract_strided_slice %39 {offsets = [0, 40], sizes = [64, 1], strides = [1, 1]} : vector<64x48xf32> to vector<64x1xf32>
    %c20 = arith.constant 20 : index
    %c0_56 = arith.constant 0 : index
    %c0_57 = arith.constant 0 : index
    %160 = vector.load %arg6[%c20, %c0_56, %c0_57] : memref<24x64x128xf32, #tpu.memory_space<vmem>>, vector<1x64x128xf32>
    %161 = vector.shape_cast %160 : vector<1x64x128xf32> to vector<64x128xf32>
    %162 = vector.broadcast %159 : vector<64x1xf32> to vector<64x128xf32>
    %163 = arith.mulf %162, %161 : vector<64x128xf32>
    %164 = arith.addf %158, %163 : vector<64x128xf32>
    %165 = vector.extract_strided_slice %39 {offsets = [0, 42], sizes = [64, 1], strides = [1, 1]} : vector<64x48xf32> to vector<64x1xf32>
    %c21 = arith.constant 21 : index
    %c0_58 = arith.constant 0 : index
    %c0_59 = arith.constant 0 : index
    %166 = vector.load %arg6[%c21, %c0_58, %c0_59] : memref<24x64x128xf32, #tpu.memory_space<vmem>>, vector<1x64x128xf32>
    %167 = vector.shape_cast %166 : vector<1x64x128xf32> to vector<64x128xf32>
    %168 = vector.broadcast %165 : vector<64x1xf32> to vector<64x128xf32>
    %169 = arith.mulf %168, %167 : vector<64x128xf32>
    %170 = arith.addf %164, %169 : vector<64x128xf32>
    %171 = vector.extract_strided_slice %39 {offsets = [0, 44], sizes = [64, 1], strides = [1, 1]} : vector<64x48xf32> to vector<64x1xf32>
    %c22 = arith.constant 22 : index
    %c0_60 = arith.constant 0 : index
    %c0_61 = arith.constant 0 : index
    %172 = vector.load %arg6[%c22, %c0_60, %c0_61] : memref<24x64x128xf32, #tpu.memory_space<vmem>>, vector<1x64x128xf32>
    %173 = vector.shape_cast %172 : vector<1x64x128xf32> to vector<64x128xf32>
    %174 = vector.broadcast %171 : vector<64x1xf32> to vector<64x128xf32>
    %175 = arith.mulf %174, %173 : vector<64x128xf32>
    %176 = arith.addf %170, %175 : vector<64x128xf32>
    %177 = vector.extract_strided_slice %39 {offsets = [0, 46], sizes = [64, 1], strides = [1, 1]} : vector<64x48xf32> to vector<64x1xf32>
    %c23 = arith.constant 23 : index
    %c0_62 = arith.constant 0 : index
    %c0_63 = arith.constant 0 : index
    %178 = vector.load %arg6[%c23, %c0_62, %c0_63] : memref<24x64x128xf32, #tpu.memory_space<vmem>>, vector<1x64x128xf32>
    %179 = vector.shape_cast %178 : vector<1x64x128xf32> to vector<64x128xf32>
    %180 = vector.broadcast %177 : vector<64x1xf32> to vector<64x128xf32>
    %181 = arith.mulf %180, %179 : vector<64x128xf32>
    %182 = arith.addf %176, %181 : vector<64x128xf32>
    %cst_64 = arith.constant dense<0.000000e+00> : vector<128xf32>
    %183 = vector.multi_reduction <add>, %182, %cst_64 [0] : vector<64x128xf32> to vector<128xf32>
    %184 = vector.shape_cast %183 : vector<128xf32> to vector<1x128xf32>
    %c0_65 = arith.constant 0 : index
    %c0_66 = arith.constant 0 : index
    %185 = vector.load %arg7[%c0_65, %c0_66] : memref<1x128xf32, #tpu.memory_space<vmem>>, vector<1x128xf32>
    %186 = arith.addf %184, %185 : vector<1x128xf32>
    %cst_67 = arith.constant 0.000000e+00 : f32
    %187 = vector.broadcast %cst_67 : f32 to vector<1x128xf32>
    %188 = arith.maximumf %186, %187 : vector<1x128xf32>
    %c0_68 = arith.constant 0 : index
    %c0_69 = arith.constant 0 : index
    %189 = vector.load %arg8[%c0_68, %c0_69] : memref<1x128xf32, #tpu.memory_space<vmem>>, vector<1x128xf32>
    %190 = arith.mulf %188, %189 : vector<1x128xf32>
    %cst_70 = arith.constant dense<0.000000e+00> : vector<1xf32>
    %191 = vector.multi_reduction <add>, %190, %cst_70 [1] : vector<1x128xf32> to vector<1xf32>
    %192 = vector.shape_cast %191 : vector<1xf32> to vector<1x1xf32>
    %c0_71 = arith.constant 0 : index
    %c0_72 = arith.constant 0 : index
    %193 = vector.load %arg9[%c0_71, %c0_72] : memref<1x1xf32, #tpu.memory_space<vmem>>, vector<1x1xf32>
    %194 = arith.addf %192, %193 : vector<1x1xf32>
    %cst_73 = arith.constant 0.000000e+00 : f32
    %195 = vector.broadcast %cst_73 : f32 to vector<1x1xf32>
    %196 = arith.subf %195, %194 : vector<1x1xf32>
    %197 = math.exp %196 : vector<1x1xf32>
    %cst_74 = arith.constant 1.000000e+00 : f32
    %198 = vector.broadcast %cst_74 : f32 to vector<1x1xf32>
    %199 = arith.addf %198, %197 : vector<1x1xf32>
    %cst_75 = arith.constant 1.000000e+00 : f32
    %200 = vector.broadcast %cst_75 : f32 to vector<1x1xf32>
    %201 = arith.divf %200, %199 : vector<1x1xf32>
    %c0_76 = arith.constant 0 : index
    %c0_77 = arith.constant 0 : index
    %c0_78 = arith.constant 0 : index
    %202 = vector.load %arg10[%c0_76, %c0_77, %c0_78] : memref<1x1x1xf32, #tpu.memory_space<vmem>>, vector<1x1x1xf32>
    %203 = vector.shape_cast %202 : vector<1x1x1xf32> to vector<1x1xf32>
    %204 = vector.shape_cast %201 : vector<1x1xf32> to vector<1x1x1xf32>
    tpu.vector_store %arg10[%c0_76, %c0_77, %c0_78], %204 {strides = array<i32>} : memref<1x1x1xf32, #tpu.memory_space<vmem>>, vector<1x1x1xf32>,
    return
  }
  func.func @transform_0(%arg0: i32) -> (i32, i32, i32) {
    %c0_i32 = arith.constant 0 : i32
    %c0_i32_0 = arith.constant 0 : i32
    %c0_i32_1 = arith.constant 0 : i32
    return %arg0, %c0_i32, %c0_i32_0 : i32, i32, i32
  }
  func.func @transform_1(%arg0: i32) -> (i32, i32) {
    %c0_i32 = arith.constant 0 : i32
    %c0_i32_0 = arith.constant 0 : i32
    %c0_i32_1 = arith.constant 0 : i32
    return %c0_i32, %c0_i32_0 : i32, i32
  }
  func.func @transform_2(%arg0: i32) -> (i32, i32) {
    %c0_i32 = arith.constant 0 : i32
    %c0_i32_0 = arith.constant 0 : i32
    %c0_i32_1 = arith.constant 0 : i32
    return %c0_i32, %c0_i32_0 : i32, i32
  }
  func.func @transform_3(%arg0: i32) -> (i32, i32) {
    %c0_i32 = arith.constant 0 : i32
    %c0_i32_0 = arith.constant 0 : i32
    %c0_i32_1 = arith.constant 0 : i32
    return %c0_i32, %c0_i32_0 : i32, i32
  }
  func.func @transform_4(%arg0: i32) -> (i32, i32) {
    %c0_i32 = arith.constant 0 : i32
    %c0_i32_0 = arith.constant 0 : i32
    %c0_i32_1 = arith.constant 0 : i32
    return %c0_i32, %c0_i32_0 : i32, i32
  }
  func.func @transform_5(%arg0: i32) -> (i32, i32, i32) {
    %c0_i32 = arith.constant 0 : i32
    %c0_i32_0 = arith.constant 0 : i32
    %c0_i32_1 = arith.constant 0 : i32
    %c0_i32_2 = arith.constant 0 : i32
    return %c0_i32, %c0_i32_0, %c0_i32_1 : i32, i32, i32
  }
  func.func @transform_6(%arg0: i32) -> (i32, i32) {
    %c0_i32 = arith.constant 0 : i32
    %c0_i32_0 = arith.constant 0 : i32
    %c0_i32_1 = arith.constant 0 : i32
    return %c0_i32, %c0_i32_0 : i32, i32
  }
  func.func @transform_7(%arg0: i32) -> (i32, i32) {
    %c0_i32 = arith.constant 0 : i32
    %c0_i32_0 = arith.constant 0 : i32
    %c0_i32_1 = arith.constant 0 : i32
    return %c0_i32, %c0_i32_0 : i32, i32
  }
  func.func @transform_8(%arg0: i32) -> (i32, i32) {
    %c0_i32 = arith.constant 0 : i32
    %c0_i32_0 = arith.constant 0 : i32
    %c0_i32_1 = arith.constant 0 : i32
    return %c0_i32, %c0_i32_0 : i32, i32
  }
  func.func @transform_9(%arg0: i32) -> (i32, i32, i32) {
    %c0_i32 = arith.constant 0 : i32
    %c0_i32_0 = arith.constant 0 : i32
    %c0_i32_1 = arith.constant 0 : i32
    return %arg0, %c0_i32, %c0_i32_0 : i32, i32, i32
  }
}

</mosaic_0001>

<llo_original>
// kernel: wake_word_forward.1
$region0: #{wake_word_forward.1}
  #allocation0 [shape = 'u32[]', space=smem, size = 0x4, offset = 0x4, fixed_abs, tag = 'smem constant byte address 0x4 - core index']
  #allocation1 [shape = 'u32[144,128]{1,0:T(1,128)}', space=vmem, size = 0x12000, scoped, tag = 'internal scratch']
  #allocation2 [shape = 'f32[1,1]{1,0:T(1,128)S(1)}', space=vmem, size = 0x200, scoped, tag = 'scoped memory for wake_word_forward.1']
  %s0 = inlined_call_operand.vmem [shape: f32[2,39,101], index: 0, kind: input, shape index: {}]
  %s1 = inlined_call_operand.vmem [shape: f32[64,39], index: 1, kind: input, shape index: {}]
  %s2 = inlined_call_operand.vmem [shape: f32[64,1], index: 2, kind: input, shape index: {}]
  %s3 = inlined_call_operand.vmem [shape: f32[64,192], index: 3, kind: input, shape index: {}]
  %s4 = inlined_call_operand.vmem [shape: f32[64,1], index: 4, kind: input, shape index: {}]
  %s5 = inlined_call_operand.hbm [shape: f32[24,64,128], index: 5, kind: input, shape index: {}]
  %s6 = inlined_call_operand.vmem [shape: f32[1,128], index: 6, kind: input, shape index: {}]
  %s7 = inlined_call_operand.vmem [shape: f32[1,128], index: 7, kind: input, shape index: {}]
  %s8 = inlined_call_operand.<no memory space> [shape: f32[1,1], index: 8, kind: input, shape index: {}]
  %s9 = inlined_call_operand.vmem [shape: f32[2,1,1], index: 9, kind: output, shape index: {}]
  %s10 = sld [smem:[#allocation0]]
  $region73: #{wake_word_forward.1} parent=0
    _
  %s12 = ssub.s32 1, %s10
  %s13 = scalar_select 0, %s12, %s10
  %v14 = vstv %s8
  %15 = vst [vmem:[#allocation2] sm:$0x1] %v14
  $region1: #{wake_word_forward.1} parent=0
    #allocation3 [shape = 'u8[786432]{0}', space=vmem, size = 0xc0000, scoped, tag = 'input window, operand 5, single buffered']
    #allocation4 [shape = 's32[2]{0}', space=sflag, size = 0x8, scoped, tag = 'scoped memory for wake_word_forward.1']
    %16 = vsyncpa [#allocation4], 0
    loop: start=0, step=1, limit=4
    $region2: #{wake_word_forward.1} parent=1 // loop_pre_header
      _
    $region3: #{wake_word_forward.1} parent=1 // loop_header
      %s18 = sphi 0, %s22
      %p19 = scmp.ge.s32.totalorder %s18, 4
      %s28 = sphi 0, %s30
      %s31 = sphi 0, %s28
      %s32 = sphi 0, %s31
      %s48 = sphi 0, %s32
      %s52 = sphi 0, %s52
      %s54 = sphi 0, %s52
      %s55 = sphi 0, %s54
      %s69 = sphi 0, %s55
      %s73 = sphi 0, %s73
      %s75 = sphi 0, %s73
      %s76 = sphi 0, %s75
      %s90 = sphi 0, %s76
      %s94 = sphi 0, %s94
      %s96 = sphi 0, %s94
      %s97 = sphi 0, %s96
      %s111 = sphi 0, %s97
      %s115 = sphi 0, %s115
      %s117 = sphi 0, %s115
      %s118 = sphi 0, %s117
      %s132 = sphi 0, %s118
      %s136 = sphi 0, %s136
      %s138 = sphi 0, %s136
      %s139 = sphi 0, %s138
      %s153 = sphi 0, %s139
      %s157 = sphi 0, %s157
      %s159 = sphi 0, %s157
      %s160 = sphi 0, %s159
      %s174 = sphi 0, %s160
      %s178 = sphi 0, %s178
      %s180 = sphi 0, %s178
      %s181 = sphi 0, %s180
      %s195 = sphi 0, %s181
      %s199 = sphi 0, %s199
      %s201 = sphi 0, %s199
      %s202 = sphi 0, %s201
      %s216 = sphi 0, %s202
      %s222 = sphi 0, %s224
      %s225 = sphi 0, %s222
      %s226 = sphi 0, %s225
      %s242 = sphi 0, %s226
    $region4: #{wake_word_forward.1} parent=1 // loop_header_branch
      %21 = sbr.rel (%p19) target = $region8
    $region5: #{wake_word_forward.1} parent=1 // loop_body
      %s23 = ssub.s32 %s18, 1
      %s24 = ssub.s32 %s18, 2
      %s25 = sadd.s32 %s18, 1
      %s26 = ssub.s32 %s18, %s25
      %p27 = scmp.eq.s32.totalorder %s26, 0
      %s29 = sadd.s32 %s28, 1
      %s30 = scalar_select %p27, %s28, %s29
      %p33 = pneg %p27
      %p34 = scmp.eq.s32.totalorder %s18, 1
      %p35 = por %p33, %p34
      %p36 = scmp.ne.s32.totalorder %s28, %s31
      %p37 = scmp.eq.s32.totalorder %s18, 0
      %p38 = por %p36, %p37
      %p39 = scmp.ne.s32.totalorder %s28, %s31
      %p40 = scmp.eq.s32.totalorder %s23, 1
      %p41 = por %p39, %p40
      %p42 = scmp.ne.s32.totalorder %s31, %s32
      %p43 = scmp.eq.s32.totalorder %s23, 0
      %p44 = por %p42, %p43
      %p45 = scmp.ne.s32.totalorder %s31, %s32
      %p46 = scmp.eq.s32.totalorder %s24, 1
      %p47 = por %p45, %p46
      %p49 = scmp.ne.s32.totalorder %s32, %s48
      %p50 = scmp.eq.s32.totalorder %s24, 0
      %p51 = por %p49, %p50
      %s53 = sadd.s32 %s52, 1
      %p56 = scmp.eq.s32.totalorder %s18, 1
      %p57 = scmp.ne.s32.totalorder %s52, %s54
      %p58 = scmp.eq.s32.totalorder %s18, 0
      %p59 = por %p57, %p58
      %p60 = scmp.ne.s32.totalorder %s52, %s54
      %p61 = scmp.eq.s32.totalorder %s23, 1
      %p62 = por %p60, %p61
      %p63 = scmp.ne.s32.totalorder %s54, %s55
      %p64 = scmp.eq.s32.totalorder %s23, 0
      %p65 = por %p63, %p64
      %p66 = scmp.ne.s32.totalorder %s54, %s55
      %p67 = scmp.eq.s32.totalorder %s24, 1
      %p68 = por %p66, %p67
      %p70 = scmp.ne.s32.totalorder %s55, %s69
      %p71 = scmp.eq.s32.totalorder %s24, 0
      %p72 = por %p70, %p71
      %s74 = sadd.s32 %s73, 1
      %p77 = scmp.eq.s32.totalorder %s18, 1
      %p78 = scmp.ne.s32.totalorder %s73, %s75
      %p79 = scmp.eq.s32.totalorder %s18, 0
      %p80 = por %p78, %p79
      %p81 = scmp.ne.s32.totalorder %s73, %s75
      %p82 = scmp.eq.s32.totalorder %s23, 1
      %p83 = por %p81, %p82
      %p84 = scmp.ne.s32.totalorder %s75, %s76
      %p85 = scmp.eq.s32.totalorder %s23, 0
      %p86 = por %p84, %p85
      %p87 = scmp.ne.s32.totalorder %s75, %s76
      %p88 = scmp.eq.s32.totalorder %s24, 1
      %p89 = por %p87, %p88
      %p91 = scmp.ne.s32.totalorder %s76, %s90
      %p92 = scmp.eq.s32.totalorder %s24, 0
      %p93 = por %p91, %p92
      %s95 = sadd.s32 %s94, 1
      %p98 = scmp.eq.s32.totalorder %s18, 1
      %p99 = scmp.ne.s32.totalorder %s94, %s96
      %p100 = scmp.eq.s32.totalorder %s18, 0
      %p101 = por %p99, %p100
      %p102 = scmp.ne.s32.totalorder %s94, %s96
      %p103 = scmp.eq.s32.totalorder %s23, 1
      %p104 = por %p102, %p103
      %p105 = scmp.ne.s32.totalorder %s96, %s97
      %p106 = scmp.eq.s32.totalorder %s23, 0
      %p107 = por %p105, %p106
      %p108 = scmp.ne.s32.totalorder %s96, %s97
      %p109 = scmp.eq.s32.totalorder %s24, 1
      %p110 = por %p108, %p109
      %p112 = scmp.ne.s32.totalorder %s97, %s111
      %p113 = scmp.eq.s32.totalorder %s24, 0
      %p114 = por %p112, %p113
      %s116 = sadd.s32 %s115, 1
      %p119 = scmp.eq.s32.totalorder %s18, 1
      %p120 = scmp.ne.s32.totalorder %s115, %s117
      %p121 = scmp.eq.s32.totalorder %s18, 0
      %p122 = por %p120, %p121
      %p123 = scmp.ne.s32.totalorder %s115, %s117
      %p124 = scmp.eq.s32.totalorder %s23, 1
      %p125 = por %p123, %p124
      %p126 = scmp.ne.s32.totalorder %s117, %s118
      %p127 = scmp.eq.s32.totalorder %s23, 0
      %p128 = por %p126, %p127
      %p129 = scmp.ne.s32.totalorder %s117, %s118
      %p130 = scmp.eq.s32.totalorder %s24, 1
      %p131 = por %p129, %p130
      %p133 = scmp.ne.s32.totalorder %s118, %s132
      %p134 = scmp.eq.s32.totalorder %s24, 0
      %p135 = por %p133, %p134
      %s137 = sadd.s32 %s136, 1
      %p140 = scmp.eq.s32.totalorder %s18, 1
      %p141 = scmp.ne.s32.totalorder %s136, %s138
      %p142 = scmp.eq.s32.totalorder %s18, 0
      %p143 = por %p141, %p142
      %p144 = scmp.ne.s32.totalorder %s136, %s138
      %p145 = scmp.eq.s32.totalorder %s23, 1
      %p146 = por %p144, %p145
      %p147 = scmp.ne.s32.totalorder %s138, %s139
      %p148 = scmp.eq.s32.totalorder %s23, 0
      %p149 = por %p147, %p148
      %p150 = scmp.ne.s32.totalorder %s138, %s139
      %p151 = scmp.eq.s32.totalorder %s24, 1
      %p152 = por %p150, %p151
      %p154 = scmp.ne.s32.totalorder %s139, %s153
      %p155 = scmp.eq.s32.totalorder %s24, 0
      %p156 = por %p154, %p155
      %s158 = sadd.s32 %s157, 1
      %p161 = scmp.eq.s32.totalorder %s18, 1
      %p162 = scmp.ne.s32.totalorder %s157, %s159
      %p163 = scmp.eq.s32.totalorder %s18, 0
      %p164 = por %p162, %p163
      %p165 = scmp.ne.s32.totalorder %s157, %s159
      %p166 = scmp.eq.s32.totalorder %s23, 1
      %p167 = por %p165, %p166
      %p168 = scmp.ne.s32.totalorder %s159, %s160
      %p169 = scmp.eq.s32.totalorder %s23, 0
      %p170 = por %p168, %p169
      %p171 = scmp.ne.s32.totalorder %s159, %s160
      %p172 = scmp.eq.s32.totalorder %s24, 1
      %p173 = por %p171, %p172
      %p175 = scmp.ne.s32.totalorder %s160, %s174
      %p176 = scmp.eq.s32.totalorder %s24, 0
      %p177 = por %p175, %p176
      %s179 = sadd.s32 %s178, 1
      %p182 = scmp.eq.s32.totalorder %s18, 1
      %p183 = scmp.ne.s32.totalorder %s178, %s180
      %p184 = scmp.eq.s32.totalorder %s18, 0
      %p185 = por %p183, %p184
      %p186 = scmp.ne.s32.totalorder %s178, %s180
      %p187 = scmp.eq.s32.totalorder %s23, 1
      %p188 = por %p186, %p187
      %p189 = scmp.ne.s32.totalorder %s180, %s181
      %p190 = scmp.eq.s32.totalorder %s23, 0
      %p191 = por %p189, %p190
      %p192 = scmp.ne.s32.totalorder %s180, %s181
      %p193 = scmp.eq.s32.totalorder %s24, 1
      %p194 = por %p192, %p193
      %p196 = scmp.ne.s32.totalorder %s181, %s195
      %p197 = scmp.eq.s32.totalorder %s24, 0
      %p198 = por %p196, %p197
      %s200 = sadd.s32 %s199, 1
      %p203 = scmp.eq.s32.totalorder %s18, 1
      %p204 = scmp.ne.s32.totalorder %s199, %s201
      %p205 = scmp.eq.s32.totalorder %s18, 0
      %p206 = por %p204, %p205
      %p207 = scmp.ne.s32.totalorder %s199, %s201
      %p208 = scmp.eq.s32.totalorder %s23, 1
      %p209 = por %p207, %p208
      %p210 = scmp.ne.s32.totalorder %s201, %s202
      %p211 = scmp.eq.s32.totalorder %s23, 0
      %p212 = por %p210, %p211
      %p213 = scmp.ne.s32.totalorder %s201, %s202
      %p214 = scmp.eq.s32.totalorder %s24, 1
      %p215 = por %p213, %p214
      %p217 = scmp.ne.s32.totalorder %s202, %s216
      %p218 = scmp.eq.s32.totalorder %s24, 0
      %p219 = por %p217, %p218
      %s220 = ssub.s32 %s18, %s25
      %p221 = scmp.eq.s32.totalorder %s220, 0
      %s223 = sadd.s32 %s222, 1
      %s224 = scalar_select %p221, %s222, %s223
      %p227 = pneg %p221
      %p228 = scmp.eq.s32.totalorder %s18, 1
      %p229 = por %p227, %p228
      %p230 = scmp.ne.s32.totalorder %s222, %s225
      %p231 = scmp.eq.s32.totalorder %s18, 0
      %p232 = por %p230, %p231
      %p233 = scmp.ne.s32.totalorder %s222, %s225
      %p234 = scmp.eq.s32.totalorder %s23, 1
      %p235 = por %p233, %p234
      %p236 = scmp.ne.s32.totalorder %s225, %s226
      %p237 = scmp.eq.s32.totalorder %s23, 0
      %p238 = por %p236, %p237
      %p239 = scmp.ne.s32.totalorder %s225, %s226
      %p240 = scmp.eq.s32.totalorder %s24, 1
      %p241 = por %p239, %p240
      %p243 = scmp.ne.s32.totalorder %s226, %s242
      %p244 = scmp.eq.s32.totalorder %s24, 0
      %p245 = por %p243, %p244
      %p246 = scmp.le.s32.totalorder 1, %s18
      %p247 = scmp.lt.s32.totalorder %s18, 3
      %p248 = pnand %p246, %p247
      %p249 = pneg %p248
      // Predicated region
      $region9: #{wake_word_forward.1} parent=5 // pred_check
        _
      $region10: #{wake_word_forward.1} parent=5 // pred_check_branch
        %251 = sbr.rel (%p248) target = $region12
      $region11: #{wake_word_forward.1} parent=5 // pred_region
        %s252 = ssub.s32 %s18, 1
        // Predicated region
        $region13: #{wake_word_forward.1} parent=11 // pred_check
          %p253 = pneg %p65
        $region14: #{wake_word_forward.1} parent=11 // pred_check_branch
          %255 = sbr.rel (%p253) target = $region16
        $region15: #{wake_word_forward.1} parent=11 // pred_region
          _
        $region16: #{wake_word_forward.1} parent=11 // pred_fallthru
          _
        // Predicated region
        $region17: #{wake_word_forward.1} parent=11 // pred_check
          %p256 = pneg %p86
        $region18: #{wake_word_forward.1} parent=11 // pred_check_branch
          %258 = sbr.rel (%p256) target = $region20
        $region19: #{wake_word_forward.1} parent=11 // pred_region
          _
        $region20: #{wake_word_forward.1} parent=11 // pred_fallthru
          _
        // Predicated region
        $region21: #{wake_word_forward.1} parent=11 // pred_check
          %p259 = pneg %p107
        $region22: #{wake_word_forward.1} parent=11 // pred_check_branch
          %261 = sbr.rel (%p259) target = $region24
        $region23: #{wake_word_forward.1} parent=11 // pred_region
          _
        $region24: #{wake_word_forward.1} parent=11 // pred_fallthru
          _
        // Predicated region
        $region25: #{wake_word_forward.1} parent=11 // pred_check
          %p262 = pneg %p128
        $region26: #{wake_word_forward.1} parent=11 // pred_check_branch
          %264 = sbr.rel (%p262) target = $region28
        $region27: #{wake_word_forward.1} parent=11 // pred_region
          _
        $region28: #{wake_word_forward.1} parent=11 // pred_fallthru
          _
        // Predicated region
        $region29: #{wake_word_forward.1} parent=11 // pred_check
          %p265 = pneg %p149
        $region30: #{wake_word_forward.1} parent=11 // pred_check_branch
          %267 = sbr.rel (%p265) target = $region32
        $region31: #{wake_word_forward.1} parent=11 // pred_region
          %s269 = ssub.s32 24576, 24576
          %270 = vsyncadd [#allocation4], %s269
          %s271 = sshll.u32 [#allocation3], 4
          %s272 = int_to_ptr.vmem [resolvable:$true] %s271
          %277 = dma.hbm_to_vmem [thread:$0]  %s5, 24576, %s272, [#allocation4], 128, 128, 8
        $region32: #{wake_word_forward.1} parent=11 // pred_fallthru
          _
        // Predicated region
        $region33: #{wake_word_forward.1} parent=11 // pred_check
          %p278 = pneg %p170
        $region34: #{wake_word_forward.1} parent=11 // pred_check_branch
          %280 = sbr.rel (%p278) target = $region36
        $region35: #{wake_word_forward.1} parent=11 // pred_region
          _
        $region36: #{wake_word_forward.1} parent=11 // pred_fallthru
          _
        // Predicated region
        $region37: #{wake_word_forward.1} parent=11 // pred_check
          %p281 = pneg %p191
        $region38: #{wake_word_forward.1} parent=11 // pred_check_branch
          %283 = sbr.rel (%p281) target = $region40
        $region39: #{wake_word_forward.1} parent=11 // pred_region
          _
        $region40: #{wake_word_forward.1} parent=11 // pred_fallthru
          _
        // Predicated region
        $region41: #{wake_word_forward.1} parent=11 // pred_check
          %p284 = pneg %p212
        $region42: #{wake_word_forward.1} parent=11 // pred_check_branch
          %286 = sbr.rel (%p284) target = $region44
        $region43: #{wake_word_forward.1} parent=11 // pred_region
          _
        $region44: #{wake_word_forward.1} parent=11 // pred_fallthru
          _
      $region12: #{wake_word_forward.1} parent=5 // pred_fallthru
        _
      %p287 = scmp.lt.s32.totalorder %s18, 2
      // Predicated region
      $region45: #{wake_word_forward.1} parent=5 // pred_check
        %p288 = pneg %p287
      $region46: #{wake_word_forward.1} parent=5 // pred_check_branch
        %290 = sbr.rel (%p288) target = $region48
      $region47: #{wake_word_forward.1} parent=5 // pred_region
        // Predicated region
        $region49: #{wake_word_forward.1} parent=47 // pred_check
          %p291 = pneg %p38
        $region50: #{wake_word_forward.1} parent=47 // pred_check_branch
          %293 = sbr.rel (%p291) target = $region52
        $region51: #{wake_word_forward.1} parent=47 // pred_region
          %p294 = scmp.lt.s32.totalorder %s18, 1
          %s295 = scalar_select %p294, %s18, 1
          %s296 = smul.addr %s295, 5
          %s297 = smul.addr %s296, 8
          %s298 = scalar_lea.vmem %s0, %s297
        $region52: #{wake_word_forward.1} parent=47 // pred_fallthru
          _
      $region48: #{wake_word_forward.1} parent=5 // pred_fallthru
        _
      %p299 = scmp.le.s32.totalorder 1, %s18
      %p300 = scmp.lt.s32.totalorder %s18, 3
      %p301 = pnand %p299, %p300
      %p302 = pneg %p301
      // Predicated region
      $region53: #{wake_word_forward.1} parent=5 // pred_check
        _
      $region54: #{wake_word_forward.1} parent=5 // pred_check_branch
        %304 = sbr.rel (%p301) target = $region56
      $region55: #{wake_word_forward.1} parent=5 // pred_region
        %s305 = ssub.s32 %s18, 1
        // Predicated region
        $region57: #{wake_word_forward.1} parent=55 // pred_check
          %p306 = pneg %p149
        $region58: #{wake_word_forward.1} parent=55 // pred_check_branch
          %308 = sbr.rel (%p306) target = $region60
        $region59: #{wake_word_forward.1} parent=55 // pred_region
          %309 = dma.done [#allocation4], 24576
        $region60: #{wake_word_forward.1} parent=55 // pred_fallthru
          _
        %p310 = scmp.lt.s32.totalorder %s23, 1
        %s311 = scalar_select %p310, %s23, 1
        %s312 = smul.addr %s311, 5
        %s313 = smul.addr %s312, 8
        %s314 = scalar_lea.vmem %s0, %s313
        %p315 = pneg %p44
        %p316 = pneg %p41
        %p317 = pneg %p65
        %p318 = pneg %p62
        %p319 = pneg %p86
        %p320 = pneg %p83
        %p321 = pneg %p107
        %p322 = pneg %p104
        %p323 = pneg %p128
        %p324 = pneg %p125
        %p325 = pneg %p149
        %p326 = pneg %p146
        %p327 = pneg %p170
        %p328 = pneg %p167
        %p329 = pneg %p191
        %p330 = pneg %p188
        %p331 = pneg %p212
        %p332 = pneg %p209
        %p333 = pneg %p238
        %p334 = pneg %p235
        %p335 = scmp.lt.s32.totalorder %s23, 1
        %s336 = scalar_select %p335, %s23, 1
        %s337 = scalar_lea.vmem %s9, %s336
        %p338 = scmp.lt.s32.totalorder %s23, 1
        %s339 = scalar_select %p338, %s23, 1
        %s340 = smul.addr %s339, 5
        %s341 = smul.addr %s340, 8
        %s342 = scalar_lea.vmem %s0, %s341
        %p343 = scmp.lt.s32.totalorder %s23, 1
        %s344 = scalar_select %p343, %s23, 1
        %s345 = scalar_lea.vmem %s9, %s344
        %v346 = vld [vmem:[%s342] sm:$0xff]
        %v347 = vld [vmem:[%s342 + $0x8] sm:$0xff]
        %v348 = vld [vmem:[%s342 + $0x10] sm:$0xff]
        %v349 = vld [vmem:[%s342 + $0x18] sm:$0xff]
        %v350 = vld [vmem:[%s342 + $0x20] sm:$0x7f]
        %v351 = vld [vmem:[%s1] sm:$0xff]
        %v352 = vld [vmem:[%s1 + $0x8] sm:$0xff]
        %v353 = vld [vmem:[%s1 + $0x10] sm:$0xff]
        %v354 = vld [vmem:[%s1 + $0x18] sm:$0xff]
        %v355 = vld [vmem:[%s1 + $0x20] sm:$0xff]
        %v356 = vld [vmem:[%s1 + $0x28] sm:$0xff]
        %v357 = vld [vmem:[%s1 + $0x30] sm:$0xff]
        %v358 = vld [vmem:[%s1 + $0x38] sm:$0xff]
        %v359 = vld [vmem:[%s2] sm:$0xff]
        %v360 = vld [vmem:[%s2 + $0x8] sm:$0xff]
        %v361 = vld [vmem:[%s2 + $0x10] sm:$0xff]
        %v362 = vld [vmem:[%s2 + $0x18] sm:$0xff]
        %v363 = vld [vmem:[%s2 + $0x20] sm:$0xff]
        %v364 = vld [vmem:[%s2 + $0x28] sm:$0xff]
        %v365 = vld [vmem:[%s2 + $0x30] sm:$0xff]
        %v366 = vld [vmem:[%s2 + $0x38] sm:$0xff]
        %368 = vset.pattern.permute.xlu0 0
        %369 = vperm.xlu0 %368, %v359
        %v370 = vpop.permute.xlu0 %369
        %373 = vset.pattern.permute.xlu0 0
        %374 = vperm.xlu0 %373, %v360
        %v375 = vpop.permute.xlu0 %374
        %378 = vset.pattern.permute.xlu0 0
        %379 = vperm.xlu0 %378, %v361
        %v380 = vpop.permute.xlu0 %379
        %383 = vset.pattern.permute.xlu0 0
        %384 = vperm.xlu0 %383, %v362
        %v385 = vpop.permute.xlu0 %384
        %388 = vset.pattern.permute.xlu0 0
        %389 = vperm.xlu0 %388, %v363
        %v390 = vpop.permute.xlu0 %389
        %393 = vset.pattern.permute.xlu0 0
        %394 = vperm.xlu0 %393, %v364
        %v395 = vpop.permute.xlu0 %394
        %398 = vset.pattern.permute.xlu0 0
        %399 = vperm.xlu0 %398, %v365
        %v400 = vpop.permute.xlu0 %399
        %403 = vset.pattern.permute.xlu0 0
        %404 = vperm.xlu0 %403, %v366
        %v405 = vpop.permute.xlu0 %404
        %vm407 = vcmask 318464
        %v409 = vsel %vm407, %v351, 0
        %v412 = vsel %vm407, %v352, 0
        %v415 = vsel %vm407, %v353, 0
        %v418 = vsel %vm407, %v354, 0
        %v421 = vsel %vm407, %v355, 0
        %v424 = vsel %vm407, %v356, 0
        %v427 = vsel %vm407, %v357, 0
        %v430 = vsel %vm407, %v358, 0
        %vm432 = vcmask 1046528
        %v434 = vsel %vm432, %v350, 0
        %436 = vmatprep.subr.mxu0 0.0
        %437 = vmatpush1.msra.mxu0 %v346
        %438 = vmatprep.subr.mxu0 0.0
        %439 = vmatpush1.msra.mxu0 %v347
        %440 = vmatprep.subr.mxu0 0.0
        %441 = vmatpush1.msra.mxu0 %v348
        %442 = vmatprep.subr.mxu0 0.0
        %443 = vmatpush1.msra.mxu0 %v349
        %444 = vmatprep.subr.mxu0 0.0
        %445 = vmatpush1.msra.mxu0 %v434
        %446 = vmatprep.subr.mxu0 0.0
        %447 = vmatpush1.msra.mxu0 0.0
        %448 = vmatprep.subr.mxu0 0.0
        %449 = vmatpush1.msra.mxu0 0.0
        %450 = vmatprep.subr.mxu0 0.0
        %451 = vmatpush1.msra.mxu0 0.0
        %452 = vmatprep.subr.mxu0 0.0
        %453 = vmatpush1.msra.mxu0 0.0
        %454 = vmatprep.subr.mxu0 0.0
        %455 = vmatpush1.msra.mxu0 0.0
        %456 = vmatprep.subr.mxu0 0.0
        %457 = vmatpush1.msra.mxu0 0.0
        %458 = vmatprep.subr.mxu0 0.0
        %459 = vmatpush1.msra.mxu0 0.0
        %460 = vmatprep.subr.mxu0 0.0
        %461 = vmatpush1.msra.mxu0 0.0
        %462 = vmatprep.subr.mxu0 0.0
        %463 = vmatpush1.msra.mxu0 0.0
        %464 = vmatprep.subr.mxu0 0.0
        %465 = vmatpush1.msra.mxu0 0.0
        %466 = vmatprep.subr.mxu0 0.0
        %467 = vmatpush1.msra.mxu0 0.0
        %468 = vmatprep.subr.mxu0 0.0
        %469 = vmatpush1.msra.mxu0 0.0
        %470 = vmatprep.subr.mxu0 0.0
        %471 = vmatpush1.msra.mxu0 0.0
        %472 = vmatprep.subr.mxu0 0.0
        %473 = vmatpush1.msra.mxu0 0.0
        %474 = vmatprep.subr.mxu0 0.0
        %475 = vmatpush1.msra.mxu0 0.0
        %476 = vmatprep.subr.mxu0 0.0
        %477 = vmatpush1.msra.mxu0 0.0
        %478 = vmatprep.subr.mxu0 0.0
        %479 = vmatpush1.msra.mxu0 0.0
        %480 = vmatprep.subr.mxu0 0.0
        %481 = vmatpush1.msra.mxu0 0.0
        %482 = vmatprep.subr.mxu0 0.0
        %483 = vmatpush1.msra.mxu0 0.0
        %484 = vmatprep.subr.mxu0 0.0
        %485 = vmatpush1.msra.mxu0 0.0
        %486 = vmatprep.subr.mxu0 0.0
        %487 = vmatpush1.msra.mxu0 0.0
        %488 = vmatprep.subr.mxu0 0.0
        %489 = vmatpush1.msra.mxu0 0.0
        %490 = vmatprep.subr.mxu0 0.0
        %491 = vmatpush1.msra.mxu0 0.0
        %492 = vmatprep.subr.mxu0 0.0
        %493 = vmatpush1.msra.mxu0 0.0
        %494 = vmatprep.subr.mxu0 0.0
        %495 = vmatpush1.msra.mxu0 0.0
        %496 = vmatprep.subr.mxu0 0.0
        %497 = vmatpush1.msra.mxu0 0.0
        %498 = vmatprep.subr.mxu0 0.0
        %499 = vmatpush1.msra.mxu0 0.0
        %500 = vmatprep.mubr.f32.mxu0 0.0
        %501 = vmatmul.mubr.f32.gmra.mrb[0].mxu0 %v409
        %v502 = vpop.f32.mrb[0].mxu0
        %v503 = vadd.f32 %v370, %v502
        %v504 = vpop.f32.mrb[0].mxu0
        %505 = vmatprep.mubr.f32.mxu0 0.0
        %506 = vmatmul.mubr.f32.gmra.mrb[0].mxu0 %v412
        %v507 = vpop.f32.mrb[0].mxu0
        %v508 = vadd.f32 %v375, %v507
        %v509 = vpop.f32.mrb[0].mxu0
        %510 = vmatprep.mubr.f32.mxu0 0.0
        %511 = vmatmul.mubr.f32.gmra.mrb[0].mxu0 %v415
        %v512 = vpop.f32.mrb[0].mxu0
        %v513 = vadd.f32 %v380, %v512
        %v514 = vpop.f32.mrb[0].mxu0
        %515 = vmatprep.mubr.f32.mxu0 0.0
        %516 = vmatmul.mubr.f32.gmra.mrb[0].mxu0 %v418
        %v517 = vpop.f32.mrb[0].mxu0
        %v518 = vadd.f32 %v385, %v517
        %v519 = vpop.f32.mrb[0].mxu0
        %520 = vmatprep.mubr.f32.mxu0 0.0
        %521 = vmatmul.mubr.f32.gmra.mrb[0].mxu0 %v421
        %v522 = vpop.f32.mrb[0].mxu0
        %v523 = vadd.f32 %v390, %v522
        %v524 = vpop.f32.mrb[0].mxu0
        %525 = vmatprep.mubr.f32.mxu0 0.0
        %526 = vmatmul.mubr.f32.gmra.mrb[0].mxu0 %v424
        %v527 = vpop.f32.mrb[0].mxu0
        %v528 = vadd.f32 %v395, %v527
        %v529 = vpop.f32.mrb[0].mxu0
        %530 = vmatprep.mubr.f32.mxu0 0.0
        %531 = vmatmul.mubr.f32.gmra.mrb[0].mxu0 %v427
        %v532 = vpop.f32.mrb[0].mxu0
        %v533 = vadd.f32 %v400, %v532
        %v534 = vpop.f32.mrb[0].mxu0
        %535 = vmatprep.mubr.f32.mxu0 0.0
        %536 = vmatmul.mubr.f32.gmra.mrb[0].mxu0 %v430
        %v537 = vpop.f32.mrb[0].mxu0
        %v538 = vadd.f32 %v405, %v537
        %v539 = vpop.f32.mrb[0].mxu0
        %540 = vdwg.mxu0
        %v541 = vmax.f32 %v503, 0.0
        %v542 = vmax.f32 %v508, 0.0
        %v543 = vmax.f32 %v513, 0.0
        %v544 = vmax.f32 %v518, 0.0
        %v545 = vmax.f32 %v523, 0.0
        %v546 = vmax.f32 %v528, 0.0
        %v547 = vmax.f32 %v533, 0.0
        %v548 = vmax.f32 %v538, 0.0
        %557 = vrot.lane.b32.xlu0 %v541, 127
        %v558 = vpop.permute.xlu0 %557
        %559 = vrot.lane.b32.xlu0 %v542, 127
        %v560 = vpop.permute.xlu0 %559
        %561 = vrot.lane.b32.xlu0 %v543, 127
        %v562 = vpop.permute.xlu0 %561
        %563 = vrot.lane.b32.xlu0 %v544, 127
        %v564 = vpop.permute.xlu0 %563
        %565 = vrot.lane.b32.xlu0 %v545, 127
        %v566 = vpop.permute.xlu0 %565
        %567 = vrot.lane.b32.xlu0 %v546, 127
        %v568 = vpop.permute.xlu0 %567
        %569 = vrot.lane.b32.xlu0 %v547, 127
        %v570 = vpop.permute.xlu0 %569
        %571 = vrot.lane.b32.xlu0 %v548, 127
        %v572 = vpop.permute.xlu0 %571
        %v581 = vmax.f32 %v541, %v558
        %v582 = vmax.f32 %v542, %v560
        %v583 = vmax.f32 %v543, %v562
        %v584 = vmax.f32 %v544, %v564
        %v585 = vmax.f32 %v545, %v566
        %v586 = vmax.f32 %v546, %v568
        %v587 = vmax.f32 %v547, %v570
        %v588 = vmax.f32 %v548, %v572
        %589 = vrot.lane.b32.xlu0 %v541, 126
        %v590 = vpop.permute.xlu0 %589
        %591 = vrot.lane.b32.xlu0 %v542, 126
        %v592 = vpop.permute.xlu0 %591
        %593 = vrot.lane.b32.xlu0 %v543, 126
        %v594 = vpop.permute.xlu0 %593
        %595 = vrot.lane.b32.xlu0 %v544, 126
        %v596 = vpop.permute.xlu0 %595
        %597 = vrot.lane.b32.xlu0 %v545, 126
        %v598 = vpop.permute.xlu0 %597
        %599 = vrot.lane.b32.xlu0 %v546, 126
        %v600 = vpop.permute.xlu0 %599
        %601 = vrot.lane.b32.xlu0 %v547, 126
        %v602 = vpop.permute.xlu0 %601
        %603 = vrot.lane.b32.xlu0 %v548, 126
        %v604 = vpop.permute.xlu0 %603
        %v613 = vmax.f32 %v581, %v590
        %v614 = vmax.f32 %v582, %v592
        %v615 = vmax.f32 %v583, %v594
        %v616 = vmax.f32 %v584, %v596
        %v617 = vmax.f32 %v585, %v598
        %v618 = vmax.f32 %v586, %v600
        %v619 = vmax.f32 %v587, %v602
        %v620 = vmax.f32 %v588, %v604
        %v621 = vlaneseq
        %v622 = vshrl.u32 %v621, 7
        %v623 = vadd.s32 %v622, 8
        %v624 = vadd.s32 %v622, 16
        %v625 = vadd.s32 %v622, 24
        %v626 = vadd.s32 %v622, 32
        %v627 = vadd.s32 %v622, 40
        %v628 = vadd.s32 %v622, 48
        %v629 = vadd.s32 %v622, 56
        %v630 = vadd.s32 %v622, 64
        %v631 = vadd.s32 %v622, 72
        %v632 = vadd.s32 %v622, 80
        %v633 = vadd.s32 %v622, 88
        %v634 = vadd.s32 %v622, 96
        %v635 = vlaneseq
        %v636 = vand.u32 %v635, 127
        %v637 = vmul.u32 %v636, 2
        %vm638 = vcmp.eq.s32.totalorder %v622, %v637
        %vm639 = vcmp.eq.s32.totalorder %v623, %v637
        %vm640 = vcmp.eq.s32.totalorder %v624, %v637
        %vm641 = vcmp.eq.s32.totalorder %v625, %v637
        %vm642 = vcmp.eq.s32.totalorder %v626, %v637
        %vm643 = vcmp.eq.s32.totalorder %v627, %v637
        %vm644 = vcmp.eq.s32.totalorder %v628, %v637
        %vm645 = vcmp.eq.s32.totalorder %v629, %v637
        %vm646 = vcmp.eq.s32.totalorder %v630, %v637
        %vm647 = vcmp.eq.s32.totalorder %v631, %v637
        %vm648 = vcmp.eq.s32.totalorder %v632, %v637
        %vm649 = vcmp.eq.s32.totalorder %v633, %v637
        %vm650 = vcmp.eq.s32.totalorder %v634, %v637
        %v651 = vsel %vm638, 1, 0
        %v652 = vsel %vm639, 1, 0
        %v653 = vsel %vm640, 1, 0
        %v654 = vsel %vm641, 1, 0
        %v655 = vsel %vm642, 1, 0
        %v656 = vsel %vm643, 1, 0
        %v657 = vsel %vm644, 1, 0
        %v658 = vsel %vm645, 1, 0
        %v659 = vsel %vm646, 1, 0
        %v660 = vsel %vm647, 1, 0
        %v661 = vsel %vm648, 1, 0
        %v662 = vsel %vm649, 1, 0
        %v663 = vsel %vm650, 1, 0
        %v664 = vcvt.s32.f32 %v651
        %v665 = vcvt.s32.f32 %v652
        %v666 = vcvt.s32.f32 %v653
        %v667 = vcvt.s32.f32 %v654
        %v668 = vcvt.s32.f32 %v655
        %v669 = vcvt.s32.f32 %v656
        %v670 = vcvt.s32.f32 %v657
        %v671 = vcvt.s32.f32 %v658
        %v672 = vcvt.s32.f32 %v659
        %v673 = vcvt.s32.f32 %v660
        %v674 = vcvt.s32.f32 %v661
        %v675 = vcvt.s32.f32 %v662
        %v676 = vcvt.s32.f32 %v663
        %vm677 = vcmask 809984
        %v679 = vsel %vm677, %v613, 0
        %v682 = vsel %vm677, %v614, 0
        %v685 = vsel %vm677, %v615, 0
        %v688 = vsel %vm677, %v616, 0
        %v691 = vsel %vm677, %v617, 0
        %v694 = vsel %vm677, %v618, 0
        %v697 = vsel %vm677, %v619, 0
        %v700 = vsel %vm677, %v620, 0
        %vm702 = vcmask 1042432
        %v704 = vsel %vm702, %v676, 0
        %706 = vmatprep.subr.mxu0 0.0
        %707 = vmatpush1.msra.mxu0 %v664
        %708 = vmatprep.subr.mxu0 0.0
        %709 = vmatpush1.msra.mxu0 %v665
        %710 = vmatprep.subr.mxu0 0.0
        %711 = vmatpush1.msra.mxu0 %v666
        %712 = vmatprep.subr.mxu0 0.0
        %713 = vmatpush1.msra.mxu0 %v667
        %714 = vmatprep.subr.mxu0 0.0
        %715 = vmatpush1.msra.mxu0 %v668
        %716 = vmatprep.subr.mxu0 0.0
        %717 = vmatpush1.msra.mxu0 %v669
        %718 = vmatprep.subr.mxu0 0.0
        %719 = vmatpush1.msra.mxu0 %v670
        %720 = vmatprep.subr.mxu0 0.0
        %721 = vmatpush1.msra.mxu0 %v671
        %722 = vmatprep.subr.mxu0 0.0
        %723 = vmatpush1.msra.mxu0 %v672
        %724 = vmatprep.subr.mxu0 0.0
        %725 = vmatpush1.msra.mxu0 %v673
        %726 = vmatprep.subr.mxu0 0.0
        %727 = vmatpush1.msra.mxu0 %v674
        %728 = vmatprep.subr.mxu0 0.0
        %729 = vmatpush1.msra.mxu0 %v675
        %730 = vmatprep.subr.mxu0 0.0
        %731 = vmatpush1.msra.mxu0 %v704
        %732 = vmatprep.subr.mxu0 0.0
        %733 = vmatpush1.msra.mxu0 0.0
        %734 = vmatprep.subr.mxu0 0.0
        %735 = vmatpush1.msra.mxu0 0.0
        %736 = vmatprep.subr.mxu0 0.0
        %737 = vmatpush1.msra.mxu0 0.0
        %738 = vmatprep.subr.mxu0 0.0
        %739 = vmatpush1.msra.mxu0 0.0
        %740 = vmatprep.subr.mxu0 0.0
        %741 = vmatpush1.msra.mxu0 0.0
        %742 = vmatprep.subr.mxu0 0.0
        %743 = vmatpush1.msra.mxu0 0.0
        %744 = vmatprep.subr.mxu0 0.0
        %745 = vmatpush1.msra.mxu0 0.0
        %746 = vmatprep.subr.mxu0 0.0
        %747 = vmatpush1.msra.mxu0 0.0
        %748 = vmatprep.subr.mxu0 0.0
        %749 = vmatpush1.msra.mxu0 0.0
        %750 = vmatprep.subr.mxu0 0.0
        %751 = vmatpush1.msra.mxu0 0.0
        %752 = vmatprep.subr.mxu0 0.0
        %753 = vmatpush1.msra.mxu0 0.0
        %754 = vmatprep.subr.mxu0 0.0
        %755 = vmatpush1.msra.mxu0 0.0
        %756 = vmatprep.subr.mxu0 0.0
        %757 = vmatpush1.msra.mxu0 0.0
        %758 = vmatprep.subr.mxu0 0.0
        %759 = vmatpush1.msra.mxu0 0.0
        %760 = vmatprep.subr.mxu0 0.0
        %761 = vmatpush1.msra.mxu0 0.0
        %762 = vmatprep.subr.mxu0 0.0
        %763 = vmatpush1.msra.mxu0 0.0
        %764 = vmatprep.subr.mxu0 0.0
        %765 = vmatpush1.msra.mxu0 0.0
        %766 = vmatprep.subr.mxu0 0.0
        %767 = vmatpush1.msra.mxu0 0.0
        %768 = vmatprep.subr.mxu0 0.0
        %769 = vmatpush1.msra.mxu0 0.0
        %770 = vmatprep.mubr.f32.mxu0 0.0
        %771 = vmatmul.mubr.f32.gmra.mrb[0].mxu0 %v679
        %v772 = vpop.f32.mrb[0].mxu0
        %v773 = vadd.f32 0.0, %v772
        %v774 = vpop.f32.mrb[0].mxu0
        %775 = vmatprep.mubr.f32.mxu0 0.0
        %776 = vmatmul.mubr.f32.gmra.mrb[0].mxu0 %v682
        %v777 = vpop.f32.mrb[0].mxu0
        %v778 = vadd.f32 0.0, %v777
        %v779 = vpop.f32.mrb[0].mxu0
        %780 = vmatprep.mubr.f32.mxu0 0.0
        %781 = vmatmul.mubr.f32.gmra.mrb[0].mxu0 %v685
        %v782 = vpop.f32.mrb[0].mxu0
        %v783 = vadd.f32 0.0, %v782
        %v784 = vpop.f32.mrb[0].mxu0
        %785 = vmatprep.mubr.f32.mxu0 0.0
        %786 = vmatmul.mubr.f32.gmra.mrb[0].mxu0 %v688
        %v787 = vpop.f32.mrb[0].mxu0
        %v788 = vadd.f32 0.0, %v787
        %v789 = vpop.f32.mrb[0].mxu0
        %790 = vmatprep.mubr.f32.mxu0 0.0
        %791 = vmatmul.mubr.f32.gmra.mrb[0].mxu0 %v691
        %v792 = vpop.f32.mrb[0].mxu0
        %v793 = vadd.f32 0.0, %v792
        %v794 = vpop.f32.mrb[0].mxu0
        %795 = vmatprep.mubr.f32.mxu0 0.0
        %796 = vmatmul.mubr.f32.gmra.mrb[0].mxu0 %v694
        %v797 = vpop.f32.mrb[0].mxu0
        %v798 = vadd.f32 0.0, %v797
        %v799 = vpop.f32.mrb[0].mxu0
        %800 = vmatprep.mubr.f32.mxu0 0.0
        %801 = vmatmul.mubr.f32.gmra.mrb[0].mxu0 %v697
        %v802 = vpop.f32.mrb[0].mxu0
        %v803 = vadd.f32 0.0, %v802
        %v804 = vpop.f32.mrb[0].mxu0
        %805 = vmatprep.mubr.f32.mxu0 0.0
        %806 = vmatmul.mubr.f32.gmra.mrb[0].mxu0 %v700
        %v807 = vpop.f32.mrb[0].mxu0
        %v808 = vadd.f32 0.0, %v807
        %v809 = vpop.f32.mrb[0].mxu0
        %810 = vdwg.mxu0
        %819 = vrot.lane.b32.xlu0 %v773, 1
        %v820 = vpop.permute.xlu0 %819
        %821 = vrot.lane.b32.xlu0 %v778, 1
        %v822 = vpop.permute.xlu0 %821
        %823 = vrot.lane.b32.xlu0 %v783, 1
        %v824 = vpop.permute.xlu0 %823
        %825 = vrot.lane.b32.xlu0 %v788, 1
        %v826 = vpop.permute.xlu0 %825
        %827 = vrot.lane.b32.xlu0 %v793, 1
        %v828 = vpop.permute.xlu0 %827
        %829 = vrot.lane.b32.xlu0 %v798, 1
        %v830 = vpop.permute.xlu0 %829
        %831 = vrot.lane.b32.xlu0 %v803, 1
        %v832 = vpop.permute.xlu0 %831
        %833 = vrot.lane.b32.xlu0 %v808, 1
        %v834 = vpop.permute.xlu0 %833
        %vm843 = vcmask 7168
        %v844 = vsel %vm843, 0.0, %v820
        %v845 = vsel %vm843, 0.0, %v822
        %v846 = vsel %vm843, 0.0, %v824
        %v847 = vsel %vm843, 0.0, %v826
        %v848 = vsel %vm843, 0.0, %v828
        %v849 = vsel %vm843, 0.0, %v830
        %v850 = vsel %vm843, 0.0, %v832
        %v851 = vsel %vm843, 0.0, %v834
        %vm852 = vcmask 416768
        %v853 = vsel %vm852, %v844, 0.0
        %v854 = vsel %vm852, %v845, 0.0
        %v855 = vsel %vm852, %v846, 0.0
        %v856 = vsel %vm852, %v847, 0.0
        %v857 = vsel %vm852, %v848, 0.0
        %v858 = vsel %vm852, %v849, 0.0
        %v859 = vsel %vm852, %v850, 0.0
        %v860 = vsel %vm852, %v851, 0.0
        %869 = vrot.lane.b32.xlu0 %v853, 127
        %v870 = vpop.permute.xlu0 %869
        %871 = vrot.lane.b32.xlu0 %v854, 127
        %v872 = vpop.permute.xlu0 %871
        %873 = vrot.lane.b32.xlu0 %v855, 127
        %v874 = vpop.permute.xlu0 %873
        %875 = vrot.lane.b32.xlu0 %v856, 127
        %v876 = vpop.permute.xlu0 %875
        %877 = vrot.lane.b32.xlu0 %v857, 127
        %v878 = vpop.permute.xlu0 %877
        %879 = vrot.lane.b32.xlu0 %v858, 127
        %v880 = vpop.permute.xlu0 %879
        %881 = vrot.lane.b32.xlu0 %v859, 127
        %v882 = vpop.permute.xlu0 %881
        %883 = vrot.lane.b32.xlu0 %v860, 127
        %v884 = vpop.permute.xlu0 %883
        %893 = vrot.lane.b32.xlu0 %v853, 126
        %v894 = vpop.permute.xlu0 %893
        %895 = vrot.lane.b32.xlu0 %v854, 126
        %v896 = vpop.permute.xlu0 %895
        %897 = vrot.lane.b32.xlu0 %v855, 126
        %v898 = vpop.permute.xlu0 %897
        %899 = vrot.lane.b32.xlu0 %v856, 126
        %v900 = vpop.permute.xlu0 %899
        %901 = vrot.lane.b32.xlu0 %v857, 126
        %v902 = vpop.permute.xlu0 %901
        %903 = vrot.lane.b32.xlu0 %v858, 126
        %v904 = vpop.permute.xlu0 %903
        %905 = vrot.lane.b32.xlu0 %v859, 126
        %v906 = vpop.permute.xlu0 %905
        %907 = vrot.lane.b32.xlu0 %v860, 126
        %v908 = vpop.permute.xlu0 %907
        %v917 = vld [vmem:[%s3] sm:$0xff]
        %v918 = vld [vmem:[%s3 + $0x8] sm:$0xff]
        %v919 = vld [vmem:[%s3 + $0x10] sm:$0xff]
        %v920 = vld [vmem:[%s3 + $0x18] sm:$0xff]
        %v921 = vld [vmem:[%s3 + $0x20] sm:$0xff]
        %v922 = vld [vmem:[%s3 + $0x28] sm:$0xff]
        %v923 = vld [vmem:[%s3 + $0x30] sm:$0xff]
        %v924 = vld [vmem:[%s3 + $0x38] sm:$0xff]
        %v925 = vld [vmem:[%s3 + $0x40] sm:$0xff]
        %v926 = vld [vmem:[%s3 + $0x48] sm:$0xff]
        %v927 = vld [vmem:[%s3 + $0x50] sm:$0xff]
        %v928 = vld [vmem:[%s3 + $0x58] sm:$0xff]
        %v929 = vld [vmem:[%s3 + $0x60] sm:$0xff]
        %v930 = vld [vmem:[%s3 + $0x68] sm:$0xff]
        %v931 = vld [vmem:[%s3 + $0x70] sm:$0xff]
        %v932 = vld [vmem:[%s3 + $0x78] sm:$0xff]
        %v933 = vld [vmem:[%s4] sm:$0xff]
        %v934 = vld [vmem:[%s4 + $0x8] sm:$0xff]
        %v935 = vld [vmem:[%s4 + $0x10] sm:$0xff]
        %v936 = vld [vmem:[%s4 + $0x18] sm:$0xff]
        %v937 = vld [vmem:[%s4 + $0x20] sm:$0xff]
        %v938 = vld [vmem:[%s4 + $0x28] sm:$0xff]
        %v939 = vld [vmem:[%s4 + $0x30] sm:$0xff]
        %v940 = vld [vmem:[%s4 + $0x38] sm:$0xff]
        %942 = vset.pattern.permute.xlu0 0
        %943 = vperm.xlu0 %942, %v933
        %v944 = vpop.permute.xlu0 %943
        %947 = vset.pattern.permute.xlu0 0
        %948 = vperm.xlu0 %947, %v934
        %v949 = vpop.permute.xlu0 %948
        %952 = vset.pattern.permute.xlu0 0
        %953 = vperm.xlu0 %952, %v935
        %v954 = vpop.permute.xlu0 %953
        %957 = vset.pattern.permute.xlu0 0
        %958 = vperm.xlu0 %957, %v936
        %v959 = vpop.permute.xlu0 %958
        %962 = vset.pattern.permute.xlu0 0
        %963 = vperm.xlu0 %962, %v937
        %v964 = vpop.permute.xlu0 %963
        %967 = vset.pattern.permute.xlu0 0
        %968 = vperm.xlu0 %967, %v938
        %v969 = vpop.permute.xlu0 %968
        %972 = vset.pattern.permute.xlu0 0
        %973 = vperm.xlu0 %972, %v939
        %v974 = vpop.permute.xlu0 %973
        %977 = vset.pattern.permute.xlu0 0
        %978 = vperm.xlu0 %977, %v940
        %v979 = vpop.permute.xlu0 %978
        %vm981 = vcmask 523264
        %v983 = vsel %vm981, %v918, 0
        %v986 = vsel %vm981, %v920, 0
        %v989 = vsel %vm981, %v922, 0
        %v992 = vsel %vm981, %v924, 0
        %v995 = vsel %vm981, %v926, 0
        %v998 = vsel %vm981, %v928, 0
        %v1001 = vsel %vm981, %v930, 0
        %v1004 = vsel %vm981, %v932, 0
        %1006 = vmatprep.subr.mxu0 0.0
        %1007 = vmatpush1.msra.mxu0 %v853
        %1008 = vmatprep.subr.mxu0 0.0
        %1009 = vmatpush1.msra.mxu0 %v854
        %1010 = vmatprep.subr.mxu0 0.0
        %1011 = vmatpush1.msra.mxu0 %v855
        %1012 = vmatprep.subr.mxu0 0.0
        %1013 = vmatpush1.msra.mxu0 %v856
        %1014 = vmatprep.subr.mxu0 0.0
        %1015 = vmatpush1.msra.mxu0 %v857
        %1016 = vmatprep.subr.mxu0 0.0
        %1017 = vmatpush1.msra.mxu0 %v858
        %1018 = vmatprep.subr.mxu0 0.0
        %1019 = vmatpush1.msra.mxu0 %v859
        %1020 = vmatprep.subr.mxu0 0.0
        %1021 = vmatpush1.msra.mxu0 %v860
        %1022 = vmatprep.subr.mxu0 0.0
        %1023 = vmatpush1.msra.mxu0 %v870
        %1024 = vmatprep.subr.mxu0 0.0
        %1025 = vmatpush1.msra.mxu0 %v872
        %1026 = vmatprep.subr.mxu0 0.0
        %1027 = vmatpush1.msra.mxu0 %v874
        %1028 = vmatprep.subr.mxu0 0.0
        %1029 = vmatpush1.msra.mxu0 %v876
        %1030 = vmatprep.subr.mxu0 0.0
        %1031 = vmatpush1.msra.mxu0 %v878
        %1032 = vmatprep.subr.mxu0 0.0
        %1033 = vmatpush1.msra.mxu0 %v880
        %1034 = vmatprep.subr.mxu0 0.0
        %1035 = vmatpush1.msra.mxu0 %v882
        %1036 = vmatprep.subr.mxu0 0.0
        %1037 = vmatpush1.msra.mxu0 %v884
        %1038 = vmatprep.subr.mxu0 0.0
        %1039 = vmatpush1.msra.mxu0 %v894
        %1040 = vmatprep.subr.mxu0 0.0
        %1041 = vmatpush1.msra.mxu0 %v896
        %1042 = vmatprep.subr.mxu0 0.0
        %1043 = vmatpush1.msra.mxu0 %v898
        %1044 = vmatprep.subr.mxu0 0.0
        %1045 = vmatpush1.msra.mxu0 %v900
        %1046 = vmatprep.subr.mxu0 0.0
        %1047 = vmatpush1.msra.mxu0 %v902
        %1048 = vmatprep.subr.mxu0 0.0
        %1049 = vmatpush1.msra.mxu0 %v904
        %1050 = vmatprep.subr.mxu0 0.0
        %1051 = vmatpush1.msra.mxu0 %v906
        %1052 = vmatprep.subr.mxu0 0.0
        %1053 = vmatpush1.msra.mxu0 %v908
        %1054 = vmatprep.subr.mxu0 0.0
        %1055 = vmatpush1.msra.mxu0 0.0
        %1056 = vmatprep.subr.mxu0 0.0
        %1057 = vmatpush1.msra.mxu0 0.0
        %1058 = vmatprep.subr.mxu0 0.0
        %1059 = vmatpush1.msra.mxu0 0.0
        %1060 = vmatprep.subr.mxu0 0.0
        %1061 = vmatpush1.msra.mxu0 0.0
        %1062 = vmatprep.subr.mxu0 0.0
        %1063 = vmatpush1.msra.mxu0 0.0
        %1064 = vmatprep.subr.mxu0 0.0
        %1065 = vmatpush1.msra.mxu0 0.0
        %1066 = vmatprep.subr.mxu0 0.0
        %1067 = vmatpush1.msra.mxu0 0.0
        %1068 = vmatprep.subr.mxu0 0.0
        %1069 = vmatpush1.msra.mxu0 0.0
        %1070 = vmatprep.mubr.f32.mxu0 %v983
        %1071 = vmatmul.mubr.f32.gmra.mrb[0].mxu0 %v917
        %v1072 = vpop.f32.mrb[0].mxu0
        %v1073 = vadd.f32 %v944, %v1072
        %v1074 = vpop.f32.mrb[0].mxu0
        %1075 = vmatprep.mubr.f32.mxu0 %v986
        %1076 = vmatmul.mubr.f32.gmra.mrb[0].mxu0 %v919
        %v1077 = vpop.f32.mrb[0].mxu0
        %v1078 = vadd.f32 %v949, %v1077
        %v1079 = vpop.f32.mrb[0].mxu0
        %1080 = vmatprep.mubr.f32.mxu0 %v989
        %1081 = vmatmul.mubr.f32.gmra.mrb[0].mxu0 %v921
        %v1082 = vpop.f32.mrb[0].mxu0
        %v1083 = vadd.f32 %v954, %v1082
        %v1084 = vpop.f32.mrb[0].mxu0
        %1085 = vmatprep.mubr.f32.mxu0 %v992
        %1086 = vmatmul.mubr.f32.gmra.mrb[0].mxu0 %v923
        %v1087 = vpop.f32.mrb[0].mxu0
        %v1088 = vadd.f32 %v959, %v1087
        %v1089 = vpop.f32.mrb[0].mxu0
        %1090 = vmatprep.mubr.f32.mxu0 %v995
        %1091 = vmatmul.mubr.f32.gmra.mrb[0].mxu0 %v925
        %v1092 = vpop.f32.mrb[0].mxu0
        %v1093 = vadd.f32 %v964, %v1092
        %v1094 = vpop.f32.mrb[0].mxu0
        %1095 = vmatprep.mubr.f32.mxu0 %v998
        %1096 = vmatmul.mubr.f32.gmra.mrb[0].mxu0 %v927
        %v1097 = vpop.f32.mrb[0].mxu0
        %v1098 = vadd.f32 %v969, %v1097
        %v1099 = vpop.f32.mrb[0].mxu0
        %1100 = vmatprep.mubr.f32.mxu0 %v1001
        %1101 = vmatmul.mubr.f32.gmra.mrb[0].mxu0 %v929
        %v1102 = vpop.f32.mrb[0].mxu0
        %v1103 = vadd.f32 %v974, %v1102
        %v1104 = vpop.f32.mrb[0].mxu0
        %1105 = vmatprep.mubr.f32.mxu0 %v1004
        %1106 = vmatmul.mubr.f32.gmra.mrb[0].mxu0 %v931
        %v1107 = vpop.f32.mrb[0].mxu0
        %v1108 = vadd.f32 %v979, %v1107
        %v1109 = vpop.f32.mrb[0].mxu0
        %1110 = vdwg.mxu0
        %v1111 = vmax.f32 %v1073, 0.0
        %v1112 = vmax.f32 %v1078, 0.0
        %v1113 = vmax.f32 %v1083, 0.0
        %v1114 = vmax.f32 %v1088, 0.0
        %v1115 = vmax.f32 %v1093, 0.0
        %v1116 = vmax.f32 %v1098, 0.0
        %v1117 = vmax.f32 %v1103, 0.0
        %v1118 = vmax.f32 %v1108, 0.0
        %1127 = vrot.lane.b32.xlu0 %v1111, 127
        %v1128 = vpop.permute.xlu0 %1127
        %1129 = vrot.lane.b32.xlu0 %v1112, 127
        %v1130 = vpop.permute.xlu0 %1129
        %1131 = vrot.lane.b32.xlu0 %v1113, 127
        %v1132 = vpop.permute.xlu0 %1131
        %1133 = vrot.lane.b32.xlu0 %v1114, 127
        %v1134 = vpop.permute.xlu0 %1133
        %1135 = vrot.lane.b32.xlu0 %v1115, 127
        %v1136 = vpop.permute.xlu0 %1135
        %1137 = vrot.lane.b32.xlu0 %v1116, 127
        %v1138 = vpop.permute.xlu0 %1137
        %1139 = vrot.lane.b32.xlu0 %v1117, 127
        %v1140 = vpop.permute.xlu0 %1139
        %1141 = vrot.lane.b32.xlu0 %v1118, 127
        %v1142 = vpop.permute.xlu0 %1141
        %v1151 = vmax.f32 %v1111, %v1128
        %v1152 = vmax.f32 %v1112, %v1130
        %v1153 = vmax.f32 %v1113, %v1132
        %v1154 = vmax.f32 %v1114, %v1134
        %v1155 = vmax.f32 %v1115, %v1136
        %v1156 = vmax.f32 %v1116, %v1138
        %v1157 = vmax.f32 %v1117, %v1140
        %v1158 = vmax.f32 %v1118, %v1142
        %1159 = vrot.lane.b32.xlu0 %v1111, 126
        %v1160 = vpop.permute.xlu0 %1159
        %1161 = vrot.lane.b32.xlu0 %v1112, 126
        %v1162 = vpop.permute.xlu0 %1161
        %1163 = vrot.lane.b32.xlu0 %v1113, 126
        %v1164 = vpop.permute.xlu0 %1163
        %1165 = vrot.lane.b32.xlu0 %v1114, 126
        %v1166 = vpop.permute.xlu0 %1165
        %1167 = vrot.lane.b32.xlu0 %v1115, 126
        %v1168 = vpop.permute.xlu0 %1167
        %1169 = vrot.lane.b32.xlu0 %v1116, 126
        %v1170 = vpop.permute.xlu0 %1169
        %1171 = vrot.lane.b32.xlu0 %v1117, 126
        %v1172 = vpop.permute.xlu0 %1171
        %1173 = vrot.lane.b32.xlu0 %v1118, 126
        %v1174 = vpop.permute.xlu0 %1173
        %v1183 = vmax.f32 %v1151, %v1160
        %v1184 = vmax.f32 %v1152, %v1162
        %v1185 = vmax.f32 %v1153, %v1164
        %v1186 = vmax.f32 %v1154, %v1166
        %v1187 = vmax.f32 %v1155, %v1168
        %v1188 = vmax.f32 %v1156, %v1170
        %v1189 = vmax.f32 %v1157, %v1172
        %v1190 = vmax.f32 %v1158, %v1174
        %v1191 = vld [vmem:[#allocation3] sm:$0xff]
        %v1192 = vld [vmem:[#allocation3 + $0x8] sm:$0xff]
        %v1193 = vld [vmem:[#allocation3 + $0x10] sm:$0xff]
        %v1194 = vld [vmem:[#allocation3 + $0x18] sm:$0xff]
        %v1195 = vld [vmem:[#allocation3 + $0x20] sm:$0xff]
        %v1196 = vld [vmem:[#allocation3 + $0x28] sm:$0xff]
        %v1197 = vld [vmem:[#allocation3 + $0x30] sm:$0xff]
        %v1198 = vld [vmem:[#allocation3 + $0x38] sm:$0xff]
        %1200 = vset.pattern.permute.xlu0 0
        %1201 = vperm.xlu0 %1200, %v1183
        %v1202 = vpop.permute.xlu0 %1201
        %1205 = vset.pattern.permute.xlu0 0
        %1206 = vperm.xlu0 %1205, %v1184
        %v1207 = vpop.permute.xlu0 %1206
        %1210 = vset.pattern.permute.xlu0 0
        %1211 = vperm.xlu0 %1210, %v1185
        %v1212 = vpop.permute.xlu0 %1211
        %1215 = vset.pattern.permute.xlu0 0
        %1216 = vperm.xlu0 %1215, %v1186
        %v1217 = vpop.permute.xlu0 %1216
        %1220 = vset.pattern.permute.xlu0 0
        %1221 = vperm.xlu0 %1220, %v1187
        %v1222 = vpop.permute.xlu0 %1221
        %1225 = vset.pattern.permute.xlu0 0
        %1226 = vperm.xlu0 %1225, %v1188
        %v1227 = vpop.permute.xlu0 %1226
        %1230 = vset.pattern.permute.xlu0 0
        %1231 = vperm.xlu0 %1230, %v1189
        %v1232 = vpop.permute.xlu0 %1231
        %1235 = vset.pattern.permute.xlu0 0
        %1236 = vperm.xlu0 %1235, %v1190
        %v1237 = vpop.permute.xlu0 %1236
        %v1239 = vmul.f32 %v1202, %v1191
        %v1240 = vmul.f32 %v1207, %v1192
        %v1241 = vmul.f32 %v1212, %v1193
        %v1242 = vmul.f32 %v1217, %v1194
        %v1243 = vmul.f32 %v1222, %v1195
        %v1244 = vmul.f32 %v1227, %v1196
        %v1245 = vmul.f32 %v1232, %v1197
        %v1246 = vmul.f32 %v1237, %v1198
        %s1247 = scalar_lea.vmem [#allocation3], 64
        %v1248 = vld [vmem:[%s1247] sm:$0xff]
        %v1249 = vld [vmem:[%s1247 + $0x8] sm:$0xff]
        %v1250 = vld [vmem:[%s1247 + $0x10] sm:$0xff]
        %v1251 = vld [vmem:[%s1247 + $0x18] sm:$0xff]
        %v1252 = vld [vmem:[%s1247 + $0x20] sm:$0xff]
        %v1253 = vld [vmem:[%s1247 + $0x28] sm:$0xff]
        %v1254 = vld [vmem:[%s1247 + $0x30] sm:$0xff]
        %v1255 = vld [vmem:[%s1247 + $0x38] sm:$0xff]
        %1256 = vset.pattern.permute.xlu0 2
        %1257 = vperm.xlu0 %1256, %v1183
        %v1258 = vpop.permute.xlu0 %1257
        %1260 = vset.pattern.permute.xlu0 2
        %1261 = vperm.xlu0 %1260, %v1184
        %v1262 = vpop.permute.xlu0 %1261
        %1264 = vset.pattern.permute.xlu0 2
        %1265 = vperm.xlu0 %1264, %v1185
        %v1266 = vpop.permute.xlu0 %1265
        %1268 = vset.pattern.permute.xlu0 2
        %1269 = vperm.xlu0 %1268, %v1186
        %v1270 = vpop.permute.xlu0 %1269
        %1272 = vset.pattern.permute.xlu0 2
        %1273 = vperm.xlu0 %1272, %v1187
        %v1274 = vpop.permute.xlu0 %1273
        %1276 = vset.pattern.permute.xlu0 2
        %1277 = vperm.xlu0 %1276, %v1188
        %v1278 = vpop.permute.xlu0 %1277
        %1280 = vset.pattern.permute.xlu0 2
        %1281 = vperm.xlu0 %1280, %v1189
        %v1282 = vpop.permute.xlu0 %1281
        %1284 = vset.pattern.permute.xlu0 2
        %1285 = vperm.xlu0 %1284, %v1190
        %v1286 = vpop.permute.xlu0 %1285
        %v1288 = vmul.f32 %v1258, %v1248
        %v1289 = vmul.f32 %v1262, %v1249
        %v1290 = vmul.f32 %v1266, %v1250
        %v1291 = vmul.f32 %v1270, %v1251
        %v1292 = vmul.f32 %v1274, %v1252
        %v1293 = vmul.f32 %v1278, %v1253
        %v1294 = vmul.f32 %v1282, %v1254
        %v1295 = vmul.f32 %v1286, %v1255
        %v1296 = vadd.f32 %v1239, %v1288
        %v1297 = vadd.f32 %v1240, %v1289
        %v1298 = vadd.f32 %v1241, %v1290
        %v1299 = vadd.f32 %v1242, %v1291
        %v1300 = vadd.f32 %v1243, %v1292
        %v1301 = vadd.f32 %v1244, %v1293
        %v1302 = vadd.f32 %v1245, %v1294
        %v1303 = vadd.f32 %v1246, %v1295
        %s1304 = scalar_lea.vmem [#allocation3], 128
        %v1305 = vld [vmem:[%s1304] sm:$0xff]
        %v1306 = vld [vmem:[%s1304 + $0x8] sm:$0xff]
        %v1307 = vld [vmem:[%s1304 + $0x10] sm:$0xff]
        %v1308 = vld [vmem:[%s1304 + $0x18] sm:$0xff]
        %v1309 = vld [vmem:[%s1304 + $0x20] sm:$0xff]
        %v1310 = vld [vmem:[%s1304 + $0x28] sm:$0xff]
        %v1311 = vld [vmem:[%s1304 + $0x30] sm:$0xff]
        %v1312 = vld [vmem:[%s1304 + $0x38] sm:$0xff]
        %1313 = vset.pattern.permute.xlu0 4
        %1314 = vperm.xlu0 %1313, %v1183
        %v1315 = vpop.permute.xlu0 %1314
        %1317 = vset.pattern.permute.xlu0 4
        %1318 = vperm.xlu0 %1317, %v1184
        %v1319 = vpop.permute.xlu0 %1318
        %1321 = vset.pattern.permute.xlu0 4
        %1322 = vperm.xlu0 %1321, %v1185
        %v1323 = vpop.permute.xlu0 %1322
        %1325 = vset.pattern.permute.xlu0 4
        %1326 = vperm.xlu0 %1325, %v1186
        %v1327 = vpop.permute.xlu0 %1326
        %1329 = vset.pattern.permute.xlu0 4
        %1330 = vperm.xlu0 %1329, %v1187
        %v1331 = vpop.permute.xlu0 %1330
        %1333 = vset.pattern.permute.xlu0 4
        %1334 = vperm.xlu0 %1333, %v1188
        %v1335 = vpop.permute.xlu0 %1334
        %1337 = vset.pattern.permute.xlu0 4
        %1338 = vperm.xlu0 %1337, %v1189
        %v1339 = vpop.permute.xlu0 %1338
        %1341 = vset.pattern.permute.xlu0 4
        %1342 = vperm.xlu0 %1341, %v1190
        %v1343 = vpop.permute.xlu0 %1342
        %v1345 = vmul.f32 %v1315, %v1305
        %v1346 = vmul.f32 %v1319, %v1306
        %v1347 = vmul.f32 %v1323, %v1307
        %v1348 = vmul.f32 %v1327, %v1308
        %v1349 = vmul.f32 %v1331, %v1309
        %v1350 = vmul.f32 %v1335, %v1310
        %v1351 = vmul.f32 %v1339, %v1311
        %v1352 = vmul.f32 %v1343, %v1312
        %v1353 = vadd.f32 %v1296, %v1345
        %v1354 = vadd.f32 %v1297, %v1346
        %v1355 = vadd.f32 %v1298, %v1347
        %v1356 = vadd.f32 %v1299, %v1348
        %v1357 = vadd.f32 %v1300, %v1349
        %v1358 = vadd.f32 %v1301, %v1350
        %v1359 = vadd.f32 %v1302, %v1351
        %v1360 = vadd.f32 %v1303, %v1352
        %s1361 = scalar_lea.vmem [#allocation3], 192
        %v1362 = vld [vmem:[%s1361] sm:$0xff]
        %v1363 = vld [vmem:[%s1361 + $0x8] sm:$0xff]
        %v1364 = vld [vmem:[%s1361 + $0x10] sm:$0xff]
        %v1365 = vld [vmem:[%s1361 + $0x18] sm:$0xff]
        %v1366 = vld [vmem:[%s1361 + $0x20] sm:$0xff]
        %v1367 = vld [vmem:[%s1361 + $0x28] sm:$0xff]
        %v1368 = vld [vmem:[%s1361 + $0x30] sm:$0xff]
        %v1369 = vld [vmem:[%s1361 + $0x38] sm:$0xff]
        %1370 = vset.pattern.permute.xlu0 6
        %1371 = vperm.xlu0 %1370, %v1183
        %v1372 = vpop.permute.xlu0 %1371
        %1374 = vset.pattern.permute.xlu0 6
        %1375 = vperm.xlu0 %1374, %v1184
        %v1376 = vpop.permute.xlu0 %1375
        %1378 = vset.pattern.permute.xlu0 6
        %1379 = vperm.xlu0 %1378, %v1185
        %v1380 = vpop.permute.xlu0 %1379
        %1382 = vset.pattern.permute.xlu0 6
        %1383 = vperm.xlu0 %1382, %v1186
        %v1384 = vpop.permute.xlu0 %1383
        %1386 = vset.pattern.permute.xlu0 6
        %1387 = vperm.xlu0 %1386, %v1187
        %v1388 = vpop.permute.xlu0 %1387
        %1390 = vset.pattern.permute.xlu0 6
        %1391 = vperm.xlu0 %1390, %v1188
        %v1392 = vpop.permute.xlu0 %1391
        %1394 = vset.pattern.permute.xlu0 6
        %1395 = vperm.xlu0 %1394, %v1189
        %v1396 = vpop.permute.xlu0 %1395
        %1398 = vset.pattern.permute.xlu0 6
        %1399 = vperm.xlu0 %1398, %v1190
        %v1400 = vpop.permute.xlu0 %1399
        %v1402 = vmul.f32 %v1372, %v1362
        %v1403 = vmul.f32 %v1376, %v1363
        %v1404 = vmul.f32 %v1380, %v1364
        %v1405 = vmul.f32 %v1384, %v1365
        %v1406 = vmul.f32 %v1388, %v1366
        %v1407 = vmul.f32 %v1392, %v1367
        %v1408 = vmul.f32 %v1396, %v1368
        %v1409 = vmul.f32 %v1400, %v1369
        %v1410 = vadd.f32 %v1353, %v1402
        %v1411 = vadd.f32 %v1354, %v1403
        %v1412 = vadd.f32 %v1355, %v1404
        %v1413 = vadd.f32 %v1356, %v1405
        %v1414 = vadd.f32 %v1357, %v1406
        %v1415 = vadd.f32 %v1358, %v1407
        %v1416 = vadd.f32 %v1359, %v1408
        %v1417 = vadd.f32 %v1360, %v1409
        %s1418 = scalar_lea.vmem [#allocation3], 256
        %v1419 = vld [vmem:[%s1418] sm:$0xff]
        %v1420 = vld [vmem:[%s1418 + $0x8] sm:$0xff]
        %v1421 = vld [vmem:[%s1418 + $0x10] sm:$0xff]
        %v1422 = vld [vmem:[%s1418 + $0x18] sm:$0xff]
        %v1423 = vld [vmem:[%s1418 + $0x20] sm:$0xff]
        %v1424 = vld [vmem:[%s1418 + $0x28] sm:$0xff]
        %v1425 = vld [vmem:[%s1418 + $0x30] sm:$0xff]
        %v1426 = vld [vmem:[%s1418 + $0x38] sm:$0xff]
        %1427 = vset.pattern.permute.xlu0 8
        %1428 = vperm.xlu0 %1427, %v1183
        %v1429 = vpop.permute.xlu0 %1428
        %1431 = vset.pattern.permute.xlu0 8
        %1432 = vperm.xlu0 %1431, %v1184
        %v1433 = vpop.permute.xlu0 %1432
        %1435 = vset.pattern.permute.xlu0 8
        %1436 = vperm.xlu0 %1435, %v1185
        %v1437 = vpop.permute.xlu0 %1436
        %1439 = vset.pattern.permute.xlu0 8
        %1440 = vperm.xlu0 %1439, %v1186
        %v1441 = vpop.permute.xlu0 %1440
        %1443 = vset.pattern.permute.xlu0 8
        %1444 = vperm.xlu0 %1443, %v1187
        %v1445 = vpop.permute.xlu0 %1444
        %1447 = vset.pattern.permute.xlu0 8
        %1448 = vperm.xlu0 %1447, %v1188
        %v1449 = vpop.permute.xlu0 %1448
        %1451 = vset.pattern.permute.xlu0 8
        %1452 = vperm.xlu0 %1451, %v1189
        %v1453 = vpop.permute.xlu0 %1452
        %1455 = vset.pattern.permute.xlu0 8
        %1456 = vperm.xlu0 %1455, %v1190
        %v1457 = vpop.permute.xlu0 %1456
        %v1459 = vmul.f32 %v1429, %v1419
        %v1460 = vmul.f32 %v1433, %v1420
        %v1461 = vmul.f32 %v1437, %v1421
        %v1462 = vmul.f32 %v1441, %v1422
        %v1463 = vmul.f32 %v1445, %v1423
        %v1464 = vmul.f32 %v1449, %v1424
        %v1465 = vmul.f32 %v1453, %v1425
        %v1466 = vmul.f32 %v1457, %v1426
        %v1467 = vadd.f32 %v1410, %v1459
        %v1468 = vadd.f32 %v1411, %v1460
        %v1469 = vadd.f32 %v1412, %v1461
        %v1470 = vadd.f32 %v1413, %v1462
        %v1471 = vadd.f32 %v1414, %v1463
        %v1472 = vadd.f32 %v1415, %v1464
        %v1473 = vadd.f32 %v1416, %v1465
        %v1474 = vadd.f32 %v1417, %v1466
        %s1475 = scalar_lea.vmem [#allocation3], 320
        %v1476 = vld [vmem:[%s1475] sm:$0xff]
        %v1477 = vld [vmem:[%s1475 + $0x8] sm:$0xff]
        %v1478 = vld [vmem:[%s1475 + $0x10] sm:$0xff]
        %v1479 = vld [vmem:[%s1475 + $0x18] sm:$0xff]
        %v1480 = vld [vmem:[%s1475 + $0x20] sm:$0xff]
        %v1481 = vld [vmem:[%s1475 + $0x28] sm:$0xff]
        %v1482 = vld [vmem:[%s1475 + $0x30] sm:$0xff]
        %v1483 = vld [vmem:[%s1475 + $0x38] sm:$0xff]
        %1484 = vset.pattern.permute.xlu0 10
        %1485 = vperm.xlu0 %1484, %v1183
        %v1486 = vpop.permute.xlu0 %1485
        %1488 = vset.pattern.permute.xlu0 10
        %1489 = vperm.xlu0 %1488, %v1184
        %v1490 = vpop.permute.xlu0 %1489
        %1492 = vset.pattern.permute.xlu0 10
        %1493 = vperm.xlu0 %1492, %v1185
        %v1494 = vpop.permute.xlu0 %1493
        %1496 = vset.pattern.permute.xlu0 10
        %1497 = vperm.xlu0 %1496, %v1186
        %v1498 = vpop.permute.xlu0 %1497
        %1500 = vset.pattern.permute.xlu0 10
        %1501 = vperm.xlu0 %1500, %v1187
        %v1502 = vpop.permute.xlu0 %1501
        %1504 = vset.pattern.permute.xlu0 10
        %1505 = vperm.xlu0 %1504, %v1188
        %v1506 = vpop.permute.xlu0 %1505
        %1508 = vset.pattern.permute.xlu0 10
        %1509 = vperm.xlu0 %1508, %v1189
        %v1510 = vpop.permute.xlu0 %1509
        %1512 = vset.pattern.permute.xlu0 10
        %1513 = vperm.xlu0 %1512, %v1190
        %v1514 = vpop.permute.xlu0 %1513
        %v1516 = vmul.f32 %v1486, %v1476
        %v1517 = vmul.f32 %v1490, %v1477
        %v1518 = vmul.f32 %v1494, %v1478
        %v1519 = vmul.f32 %v1498, %v1479
        %v1520 = vmul.f32 %v1502, %v1480
        %v1521 = vmul.f32 %v1506, %v1481
        %v1522 = vmul.f32 %v1510, %v1482
        %v1523 = vmul.f32 %v1514, %v1483
        %v1524 = vadd.f32 %v1467, %v1516
        %v1525 = vadd.f32 %v1468, %v1517
        %v1526 = vadd.f32 %v1469, %v1518
        %v1527 = vadd.f32 %v1470, %v1519
        %v1528 = vadd.f32 %v1471, %v1520
        %v1529 = vadd.f32 %v1472, %v1521
        %v1530 = vadd.f32 %v1473, %v1522
        %v1531 = vadd.f32 %v1474, %v1523
        %s1532 = scalar_lea.vmem [#allocation3], 384
        %v1533 = vld [vmem:[%s1532] sm:$0xff]
        %v1534 = vld [vmem:[%s1532 + $0x8] sm:$0xff]
        %v1535 = vld [vmem:[%s1532 + $0x10] sm:$0xff]
        %v1536 = vld [vmem:[%s1532 + $0x18] sm:$0xff]
        %v1537 = vld [vmem:[%s1532 + $0x20] sm:$0xff]
        %v1538 = vld [vmem:[%s1532 + $0x28] sm:$0xff]
        %v1539 = vld [vmem:[%s1532 + $0x30] sm:$0xff]
        %v1540 = vld [vmem:[%s1532 + $0x38] sm:$0xff]
        %1541 = vset.pattern.permute.xlu0 12
        %1542 = vperm.xlu0 %1541, %v1183
        %v1543 = vpop.permute.xlu0 %1542
        %1545 = vset.pattern.permute.xlu0 12
        %1546 = vperm.xlu0 %1545, %v1184
        %v1547 = vpop.permute.xlu0 %1546
        %1549 = vset.pattern.permute.xlu0 12
        %1550 = vperm.xlu0 %1549, %v1185
        %v1551 = vpop.permute.xlu0 %1550
        %1553 = vset.pattern.permute.xlu0 12
        %1554 = vperm.xlu0 %1553, %v1186
        %v1555 = vpop.permute.xlu0 %1554
        %1557 = vset.pattern.permute.xlu0 12
        %1558 = vperm.xlu0 %1557, %v1187
        %v1559 = vpop.permute.xlu0 %1558
        %1561 = vset.pattern.permute.xlu0 12
        %1562 = vperm.xlu0 %1561, %v1188
        %v1563 = vpop.permute.xlu0 %1562
        %1565 = vset.pattern.permute.xlu0 12
        %1566 = vperm.xlu0 %1565, %v1189
        %v1567 = vpop.permute.xlu0 %1566
        %1569 = vset.pattern.permute.xlu0 12
        %1570 = vperm.xlu0 %1569, %v1190
        %v1571 = vpop.permute.xlu0 %1570
        %v1573 = vmul.f32 %v1543, %v1533
        %v1574 = vmul.f32 %v1547, %v1534
        %v1575 = vmul.f32 %v1551, %v1535
        %v1576 = vmul.f32 %v1555, %v1536
        %v1577 = vmul.f32 %v1559, %v1537
        %v1578 = vmul.f32 %v1563, %v1538
        %v1579 = vmul.f32 %v1567, %v1539
        %v1580 = vmul.f32 %v1571, %v1540
        %v1581 = vadd.f32 %v1524, %v1573
        %v1582 = vadd.f32 %v1525, %v1574
        %v1583 = vadd.f32 %v1526, %v1575
        %v1584 = vadd.f32 %v1527, %v1576
        %v1585 = vadd.f32 %v1528, %v1577
        %v1586 = vadd.f32 %v1529, %v1578
        %v1587 = vadd.f32 %v1530, %v1579
        %v1588 = vadd.f32 %v1531, %v1580
        %s1589 = scalar_lea.vmem [#allocation3], 448
        %v1590 = vld [vmem:[%s1589] sm:$0xff]
        %v1591 = vld [vmem:[%s1589 + $0x8] sm:$0xff]
        %v1592 = vld [vmem:[%s1589 + $0x10] sm:$0xff]
        %v1593 = vld [vmem:[%s1589 + $0x18] sm:$0xff]
        %v1594 = vld [vmem:[%s1589 + $0x20] sm:$0xff]
        %v1595 = vld [vmem:[%s1589 + $0x28] sm:$0xff]
        %v1596 = vld [vmem:[%s1589 + $0x30] sm:$0xff]
        %v1597 = vld [vmem:[%s1589 + $0x38] sm:$0xff]
        %1598 = vset.pattern.permute.xlu0 14
        %1599 = vperm.xlu0 %1598, %v1183
        %v1600 = vpop.permute.xlu0 %1599
        %1602 = vset.pattern.permute.xlu0 14
        %1603 = vperm.xlu0 %1602, %v1184
        %v1604 = vpop.permute.xlu0 %1603
        %1606 = vset.pattern.permute.xlu0 14
        %1607 = vperm.xlu0 %1606, %v1185
        %v1608 = vpop.permute.xlu0 %1607
        %1610 = vset.pattern.permute.xlu0 14
        %1611 = vperm.xlu0 %1610, %v1186
        %v1612 = vpop.permute.xlu0 %1611
        %1614 = vset.pattern.permute.xlu0 14
        %1615 = vperm.xlu0 %1614, %v1187
        %v1616 = vpop.permute.xlu0 %1615
        %1618 = vset.pattern.permute.xlu0 14
        %1619 = vperm.xlu0 %1618, %v1188
        %v1620 = vpop.permute.xlu0 %1619
        %1622 = vset.pattern.permute.xlu0 14
        %1623 = vperm.xlu0 %1622, %v1189
        %v1624 = vpop.permute.xlu0 %1623
        %1626 = vset.pattern.permute.xlu0 14
        %1627 = vperm.xlu0 %1626, %v1190
        %v1628 = vpop.permute.xlu0 %1627
        %v1630 = vmul.f32 %v1600, %v1590
        %v1631 = vmul.f32 %v1604, %v1591
        %v1632 = vmul.f32 %v1608, %v1592
        %v1633 = vmul.f32 %v1612, %v1593
        %v1634 = vmul.f32 %v1616, %v1594
        %v1635 = vmul.f32 %v1620, %v1595
        %v1636 = vmul.f32 %v1624, %v1596
        %v1637 = vmul.f32 %v1628, %v1597
        %v1638 = vadd.f32 %v1581, %v1630
        %v1639 = vadd.f32 %v1582, %v1631
        %v1640 = vadd.f32 %v1583, %v1632
        %v1641 = vadd.f32 %v1584, %v1633
        %v1642 = vadd.f32 %v1585, %v1634
        %v1643 = vadd.f32 %v1586, %v1635
        %v1644 = vadd.f32 %v1587, %v1636
        %v1645 = vadd.f32 %v1588, %v1637
        %s1646 = scalar_lea.vmem [#allocation3], 512
        %v1647 = vld [vmem:[%s1646] sm:$0xff]
        %v1648 = vld [vmem:[%s1646 + $0x8] sm:$0xff]
        %v1649 = vld [vmem:[%s1646 + $0x10] sm:$0xff]
        %v1650 = vld [vmem:[%s1646 + $0x18] sm:$0xff]
        %v1651 = vld [vmem:[%s1646 + $0x20] sm:$0xff]
        %v1652 = vld [vmem:[%s1646 + $0x28] sm:$0xff]
        %v1653 = vld [vmem:[%s1646 + $0x30] sm:$0xff]
        %v1654 = vld [vmem:[%s1646 + $0x38] sm:$0xff]
        %1655 = vset.pattern.permute.xlu0 16
        %1656 = vperm.xlu0 %1655, %v1183
        %v1657 = vpop.permute.xlu0 %1656
        %1659 = vset.pattern.permute.xlu0 16
        %1660 = vperm.xlu0 %1659, %v1184
        %v1661 = vpop.permute.xlu0 %1660
        %1663 = vset.pattern.permute.xlu0 16
        %1664 = vperm.xlu0 %1663, %v1185
        %v1665 = vpop.permute.xlu0 %1664
        %1667 = vset.pattern.permute.xlu0 16
        %1668 = vperm.xlu0 %1667, %v1186
        %v1669 = vpop.permute.xlu0 %1668
        %1671 = vset.pattern.permute.xlu0 16
        %1672 = vperm.xlu0 %1671, %v1187
        %v1673 = vpop.permute.xlu0 %1672
        %1675 = vset.pattern.permute.xlu0 16
        %1676 = vperm.xlu0 %1675, %v1188
        %v1677 = vpop.permute.xlu0 %1676
        %1679 = vset.pattern.permute.xlu0 16
        %1680 = vperm.xlu0 %1679, %v1189
        %v1681 = vpop.permute.xlu0 %1680
        %1683 = vset.pattern.permute.xlu0 16
        %1684 = vperm.xlu0 %1683, %v1190
        %v1685 = vpop.permute.xlu0 %1684
        %v1687 = vmul.f32 %v1657, %v1647
        %v1688 = vmul.f32 %v1661, %v1648
        %v1689 = vmul.f32 %v1665, %v1649
        %v1690 = vmul.f32 %v1669, %v1650
        %v1691 = vmul.f32 %v1673, %v1651
        %v1692 = vmul.f32 %v1677, %v1652
        %v1693 = vmul.f32 %v1681, %v1653
        %v1694 = vmul.f32 %v1685, %v1654
        %v1695 = vadd.f32 %v1638, %v1687
        %v1696 = vadd.f32 %v1639, %v1688
        %v1697 = vadd.f32 %v1640, %v1689
        %v1698 = vadd.f32 %v1641, %v1690
        %v1699 = vadd.f32 %v1642, %v1691
        %v1700 = vadd.f32 %v1643, %v1692
        %v1701 = vadd.f32 %v1644, %v1693
        %v1702 = vadd.f32 %v1645, %v1694
        %s1703 = scalar_lea.vmem [#allocation3], 576
        %v1704 = vld [vmem:[%s1703] sm:$0xff]
        %v1705 = vld [vmem:[%s1703 + $0x8] sm:$0xff]
        %v1706 = vld [vmem:[%s1703 + $0x10] sm:$0xff]
        %v1707 = vld [vmem:[%s1703 + $0x18] sm:$0xff]
        %v1708 = vld [vmem:[%s1703 + $0x20] sm:$0xff]
        %v1709 = vld [vmem:[%s1703 + $0x28] sm:$0xff]
        %v1710 = vld [vmem:[%s1703 + $0x30] sm:$0xff]
        %v1711 = vld [vmem:[%s1703 + $0x38] sm:$0xff]
        %1712 = vset.pattern.permute.xlu0 18
        %1713 = vperm.xlu0 %1712, %v1183
        %v1714 = vpop.permute.xlu0 %1713
        %1716 = vset.pattern.permute.xlu0 18
        %1717 = vperm.xlu0 %1716, %v1184
        %v1718 = vpop.permute.xlu0 %1717
        %1720 = vset.pattern.permute.xlu0 18
        %1721 = vperm.xlu0 %1720, %v1185
        %v1722 = vpop.permute.xlu0 %1721
        %1724 = vset.pattern.permute.xlu0 18
        %1725 = vperm.xlu0 %1724, %v1186
        %v1726 = vpop.permute.xlu0 %1725
        %1728 = vset.pattern.permute.xlu0 18
        %1729 = vperm.xlu0 %1728, %v1187
        %v1730 = vpop.permute.xlu0 %1729
        %1732 = vset.pattern.permute.xlu0 18
        %1733 = vperm.xlu0 %1732, %v1188
        %v1734 = vpop.permute.xlu0 %1733
        %1736 = vset.pattern.permute.xlu0 18
        %1737 = vperm.xlu0 %1736, %v1189
        %v1738 = vpop.permute.xlu0 %1737
        %1740 = vset.pattern.permute.xlu0 18
        %1741 = vperm.xlu0 %1740, %v1190
        %v1742 = vpop.permute.xlu0 %1741
        %v1744 = vmul.f32 %v1714, %v1704
        %v1745 = vmul.f32 %v1718, %v1705
        %v1746 = vmul.f32 %v1722, %v1706
        %v1747 = vmul.f32 %v1726, %v1707
        %v1748 = vmul.f32 %v1730, %v1708
        %v1749 = vmul.f32 %v1734, %v1709
        %v1750 = vmul.f32 %v1738, %v1710
        %v1751 = vmul.f32 %v1742, %v1711
        %v1752 = vadd.f32 %v1695, %v1744
        %v1753 = vadd.f32 %v1696, %v1745
        %v1754 = vadd.f32 %v1697, %v1746
        %v1755 = vadd.f32 %v1698, %v1747
        %v1756 = vadd.f32 %v1699, %v1748
        %v1757 = vadd.f32 %v1700, %v1749
        %v1758 = vadd.f32 %v1701, %v1750
        %v1759 = vadd.f32 %v1702, %v1751
        %s1760 = scalar_lea.vmem [#allocation3], 640
        %v1761 = vld [vmem:[%s1760] sm:$0xff]
        %v1762 = vld [vmem:[%s1760 + $0x8] sm:$0xff]
        %v1763 = vld [vmem:[%s1760 + $0x10] sm:$0xff]
        %v1764 = vld [vmem:[%s1760 + $0x18] sm:$0xff]
        %v1765 = vld [vmem:[%s1760 + $0x20] sm:$0xff]
        %v1766 = vld [vmem:[%s1760 + $0x28] sm:$0xff]
        %v1767 = vld [vmem:[%s1760 + $0x30] sm:$0xff]
        %v1768 = vld [vmem:[%s1760 + $0x38] sm:$0xff]
        %1769 = vset.pattern.permute.xlu0 20
        %1770 = vperm.xlu0 %1769, %v1183
        %v1771 = vpop.permute.xlu0 %1770
        %1773 = vset.pattern.permute.xlu0 20
        %1774 = vperm.xlu0 %1773, %v1184
        %v1775 = vpop.permute.xlu0 %1774
        %1777 = vset.pattern.permute.xlu0 20
        %1778 = vperm.xlu0 %1777, %v1185
        %v1779 = vpop.permute.xlu0 %1778
        %1781 = vset.pattern.permute.xlu0 20
        %1782 = vperm.xlu0 %1781, %v1186
        %v1783 = vpop.permute.xlu0 %1782
        %1785 = vset.pattern.permute.xlu0 20
        %1786 = vperm.xlu0 %1785, %v1187
        %v1787 = vpop.permute.xlu0 %1786
        %1789 = vset.pattern.permute.xlu0 20
        %1790 = vperm.xlu0 %1789, %v1188
        %v1791 = vpop.permute.xlu0 %1790
        %1793 = vset.pattern.permute.xlu0 20
        %1794 = vperm.xlu0 %1793, %v1189
        %v1795 = vpop.permute.xlu0 %1794
        %1797 = vset.pattern.permute.xlu0 20
        %1798 = vperm.xlu0 %1797, %v1190
        %v1799 = vpop.permute.xlu0 %1798
        %v1801 = vmul.f32 %v1771, %v1761
        %v1802 = vmul.f32 %v1775, %v1762
        %v1803 = vmul.f32 %v1779, %v1763
        %v1804 = vmul.f32 %v1783, %v1764
        %v1805 = vmul.f32 %v1787, %v1765
        %v1806 = vmul.f32 %v1791, %v1766
        %v1807 = vmul.f32 %v1795, %v1767
        %v1808 = vmul.f32 %v1799, %v1768
        %v1809 = vadd.f32 %v1752, %v1801
        %v1810 = vadd.f32 %v1753, %v1802
        %v1811 = vadd.f32 %v1754, %v1803
        %v1812 = vadd.f32 %v1755, %v1804
        %v1813 = vadd.f32 %v1756, %v1805
        %v1814 = vadd.f32 %v1757, %v1806
        %v1815 = vadd.f32 %v1758, %v1807
        %v1816 = vadd.f32 %v1759, %v1808
        %s1817 = scalar_lea.vmem [#allocation3], 704
        %v1818 = vld [vmem:[%s1817] sm:$0xff]
        %v1819 = vld [vmem:[%s1817 + $0x8] sm:$0xff]
        %v1820 = vld [vmem:[%s1817 + $0x10] sm:$0xff]
        %v1821 = vld [vmem:[%s1817 + $0x18] sm:$0xff]
        %v1822 = vld [vmem:[%s1817 + $0x20] sm:$0xff]
        %v1823 = vld [vmem:[%s1817 + $0x28] sm:$0xff]
        %v1824 = vld [vmem:[%s1817 + $0x30] sm:$0xff]
        %v1825 = vld [vmem:[%s1817 + $0x38] sm:$0xff]
        %1826 = vset.pattern.permute.xlu0 22
        %1827 = vperm.xlu0 %1826, %v1183
        %v1828 = vpop.permute.xlu0 %1827
        %1830 = vset.pattern.permute.xlu0 22
        %1831 = vperm.xlu0 %1830, %v1184
        %v1832 = vpop.permute.xlu0 %1831
        %1834 = vset.pattern.permute.xlu0 22
        %1835 = vperm.xlu0 %1834, %v1185
        %v1836 = vpop.permute.xlu0 %1835
        %1838 = vset.pattern.permute.xlu0 22
        %1839 = vperm.xlu0 %1838, %v1186
        %v1840 = vpop.permute.xlu0 %1839
        %1842 = vset.pattern.permute.xlu0 22
        %1843 = vperm.xlu0 %1842, %v1187
        %v1844 = vpop.permute.xlu0 %1843
        %1846 = vset.pattern.permute.xlu0 22
        %1847 = vperm.xlu0 %1846, %v1188
        %v1848 = vpop.permute.xlu0 %1847
        %1850 = vset.pattern.permute.xlu0 22
        %1851 = vperm.xlu0 %1850, %v1189
        %v1852 = vpop.permute.xlu0 %1851
        %1854 = vset.pattern.permute.xlu0 22
        %1855 = vperm.xlu0 %1854, %v1190
        %v1856 = vpop.permute.xlu0 %1855
        %v1858 = vmul.f32 %v1828, %v1818
        %v1859 = vmul.f32 %v1832, %v1819
        %v1860 = vmul.f32 %v1836, %v1820
        %v1861 = vmul.f32 %v1840, %v1821
        %v1862 = vmul.f32 %v1844, %v1822
        %v1863 = vmul.f32 %v1848, %v1823
        %v1864 = vmul.f32 %v1852, %v1824
        %v1865 = vmul.f32 %v1856, %v1825
        %v1866 = vadd.f32 %v1809, %v1858
        %v1867 = vadd.f32 %v1810, %v1859
        %v1868 = vadd.f32 %v1811, %v1860
        %v1869 = vadd.f32 %v1812, %v1861
        %v1870 = vadd.f32 %v1813, %v1862
        %v1871 = vadd.f32 %v1814, %v1863
        %v1872 = vadd.f32 %v1815, %v1864
        %v1873 = vadd.f32 %v1816, %v1865
        %s1874 = scalar_lea.vmem [#allocation3], 768
        %v1875 = vld [vmem:[%s1874] sm:$0xff]
        %v1876 = vld [vmem:[%s1874 + $0x8] sm:$0xff]
        %v1877 = vld [vmem:[%s1874 + $0x10] sm:$0xff]
        %v1878 = vld [vmem:[%s1874 + $0x18] sm:$0xff]
        %v1879 = vld [vmem:[%s1874 + $0x20] sm:$0xff]
        %v1880 = vld [vmem:[%s1874 + $0x28] sm:$0xff]
        %v1881 = vld [vmem:[%s1874 + $0x30] sm:$0xff]
        %v1882 = vld [vmem:[%s1874 + $0x38] sm:$0xff]
        %1883 = vset.pattern.permute.xlu0 24
        %1884 = vperm.xlu0 %1883, %v1183
        %v1885 = vpop.permute.xlu0 %1884
        %1887 = vset.pattern.permute.xlu0 24
        %1888 = vperm.xlu0 %1887, %v1184
        %v1889 = vpop.permute.xlu0 %1888
        %1891 = vset.pattern.permute.xlu0 24
        %1892 = vperm.xlu0 %1891, %v1185
        %v1893 = vpop.permute.xlu0 %1892
        %1895 = vset.pattern.permute.xlu0 24
        %1896 = vperm.xlu0 %1895, %v1186
        %v1897 = vpop.permute.xlu0 %1896
        %1899 = vset.pattern.permute.xlu0 24
        %1900 = vperm.xlu0 %1899, %v1187
        %v1901 = vpop.permute.xlu0 %1900
        %1903 = vset.pattern.permute.xlu0 24
        %1904 = vperm.xlu0 %1903, %v1188
        %v1905 = vpop.permute.xlu0 %1904
        %1907 = vset.pattern.permute.xlu0 24
        %1908 = vperm.xlu0 %1907, %v1189
        %v1909 = vpop.permute.xlu0 %1908
        %1911 = vset.pattern.permute.xlu0 24
        %1912 = vperm.xlu0 %1911, %v1190
        %v1913 = vpop.permute.xlu0 %1912
        %v1915 = vmul.f32 %v1885, %v1875
        %v1916 = vmul.f32 %v1889, %v1876
        %v1917 = vmul.f32 %v1893, %v1877
        %v1918 = vmul.f32 %v1897, %v1878
        %v1919 = vmul.f32 %v1901, %v1879
        %v1920 = vmul.f32 %v1905, %v1880
        %v1921 = vmul.f32 %v1909, %v1881
        %v1922 = vmul.f32 %v1913, %v1882
        %v1923 = vadd.f32 %v1866, %v1915
        %v1924 = vadd.f32 %v1867, %v1916
        %v1925 = vadd.f32 %v1868, %v1917
        %v1926 = vadd.f32 %v1869, %v1918
        %v1927 = vadd.f32 %v1870, %v1919
        %v1928 = vadd.f32 %v1871, %v1920
        %v1929 = vadd.f32 %v1872, %v1921
        %v1930 = vadd.f32 %v1873, %v1922
        %s1931 = scalar_lea.vmem [#allocation3], 832
        %v1932 = vld [vmem:[%s1931] sm:$0xff]
        %v1933 = vld [vmem:[%s1931 + $0x8] sm:$0xff]
        %v1934 = vld [vmem:[%s1931 + $0x10] sm:$0xff]
        %v1935 = vld [vmem:[%s1931 + $0x18] sm:$0xff]
        %v1936 = vld [vmem:[%s1931 + $0x20] sm:$0xff]
        %v1937 = vld [vmem:[%s1931 + $0x28] sm:$0xff]
        %v1938 = vld [vmem:[%s1931 + $0x30] sm:$0xff]
        %v1939 = vld [vmem:[%s1931 + $0x38] sm:$0xff]
        %1940 = vset.pattern.permute.xlu0 26
        %1941 = vperm.xlu0 %1940, %v1183
        %v1942 = vpop.permute.xlu0 %1941
        %1944 = vset.pattern.permute.xlu0 26
        %1945 = vperm.xlu0 %1944, %v1184
        %v1946 = vpop.permute.xlu0 %1945
        %1948 = vset.pattern.permute.xlu0 26
        %1949 = vperm.xlu0 %1948, %v1185
        %v1950 = vpop.permute.xlu0 %1949
        %1952 = vset.pattern.permute.xlu0 26
        %1953 = vperm.xlu0 %1952, %v1186
        %v1954 = vpop.permute.xlu0 %1953
        %1956 = vset.pattern.permute.xlu0 26
        %1957 = vperm.xlu0 %1956, %v1187
        %v1958 = vpop.permute.xlu0 %1957
        %1960 = vset.pattern.permute.xlu0 26
        %1961 = vperm.xlu0 %1960, %v1188
        %v1962 = vpop.permute.xlu0 %1961
        %1964 = vset.pattern.permute.xlu0 26
        %1965 = vperm.xlu0 %1964, %v1189
        %v1966 = vpop.permute.xlu0 %1965
        %1968 = vset.pattern.permute.xlu0 26
        %1969 = vperm.xlu0 %1968, %v1190
        %v1970 = vpop.permute.xlu0 %1969
        %v1972 = vmul.f32 %v1942, %v1932
        %v1973 = vmul.f32 %v1946, %v1933
        %v1974 = vmul.f32 %v1950, %v1934
        %v1975 = vmul.f32 %v1954, %v1935
        %v1976 = vmul.f32 %v1958, %v1936
        %v1977 = vmul.f32 %v1962, %v1937
        %v1978 = vmul.f32 %v1966, %v1938
        %v1979 = vmul.f32 %v1970, %v1939
        %v1980 = vadd.f32 %v1923, %v1972
        %v1981 = vadd.f32 %v1924, %v1973
        %v1982 = vadd.f32 %v1925, %v1974
        %v1983 = vadd.f32 %v1926, %v1975
        %v1984 = vadd.f32 %v1927, %v1976
        %v1985 = vadd.f32 %v1928, %v1977
        %v1986 = vadd.f32 %v1929, %v1978
        %v1987 = vadd.f32 %v1930, %v1979
        %s1988 = scalar_lea.vmem [#allocation3], 896
        %v1989 = vld [vmem:[%s1988] sm:$0xff]
        %v1990 = vld [vmem:[%s1988 + $0x8] sm:$0xff]
        %v1991 = vld [vmem:[%s1988 + $0x10] sm:$0xff]
        %v1992 = vld [vmem:[%s1988 + $0x18] sm:$0xff]
        %v1993 = vld [vmem:[%s1988 + $0x20] sm:$0xff]
        %v1994 = vld [vmem:[%s1988 + $0x28] sm:$0xff]
        %v1995 = vld [vmem:[%s1988 + $0x30] sm:$0xff]
        %v1996 = vld [vmem:[%s1988 + $0x38] sm:$0xff]
        %1997 = vset.pattern.permute.xlu0 28
        %1998 = vperm.xlu0 %1997, %v1183
        %v1999 = vpop.permute.xlu0 %1998
        %2001 = vset.pattern.permute.xlu0 28
        %2002 = vperm.xlu0 %2001, %v1184
        %v2003 = vpop.permute.xlu0 %2002
        %2005 = vset.pattern.permute.xlu0 28
        %2006 = vperm.xlu0 %2005, %v1185
        %v2007 = vpop.permute.xlu0 %2006
        %2009 = vset.pattern.permute.xlu0 28
        %2010 = vperm.xlu0 %2009, %v1186
        %v2011 = vpop.permute.xlu0 %2010
        %2013 = vset.pattern.permute.xlu0 28
        %2014 = vperm.xlu0 %2013, %v1187
        %v2015 = vpop.permute.xlu0 %2014
        %2017 = vset.pattern.permute.xlu0 28
        %2018 = vperm.xlu0 %2017, %v1188
        %v2019 = vpop.permute.xlu0 %2018
        %2021 = vset.pattern.permute.xlu0 28
        %2022 = vperm.xlu0 %2021, %v1189
        %v2023 = vpop.permute.xlu0 %2022
        %2025 = vset.pattern.permute.xlu0 28
        %2026 = vperm.xlu0 %2025, %v1190
        %v2027 = vpop.permute.xlu0 %2026
        %v2029 = vmul.f32 %v1999, %v1989
        %v2030 = vmul.f32 %v2003, %v1990
        %v2031 = vmul.f32 %v2007, %v1991
        %v2032 = vmul.f32 %v2011, %v1992
        %v2033 = vmul.f32 %v2015, %v1993
        %v2034 = vmul.f32 %v2019, %v1994
        %v2035 = vmul.f32 %v2023, %v1995
        %v2036 = vmul.f32 %v2027, %v1996
        %v2037 = vadd.f32 %v1980, %v2029
        %v2038 = vadd.f32 %v1981, %v2030
        %v2039 = vadd.f32 %v1982, %v2031
        %v2040 = vadd.f32 %v1983, %v2032
        %v2041 = vadd.f32 %v1984, %v2033
        %v2042 = vadd.f32 %v1985, %v2034
        %v2043 = vadd.f32 %v1986, %v2035
        %v2044 = vadd.f32 %v1987, %v2036
        %s2045 = scalar_lea.vmem [#allocation3], 960
        %v2046 = vld [vmem:[%s2045] sm:$0xff]
        %v2047 = vld [vmem:[%s2045 + $0x8] sm:$0xff]
        %v2048 = vld [vmem:[%s2045 + $0x10] sm:$0xff]
        %v2049 = vld [vmem:[%s2045 + $0x18] sm:$0xff]
        %v2050 = vld [vmem:[%s2045 + $0x20] sm:$0xff]
        %v2051 = vld [vmem:[%s2045 + $0x28] sm:$0xff]
        %v2052 = vld [vmem:[%s2045 + $0x30] sm:$0xff]
        %v2053 = vld [vmem:[%s2045 + $0x38] sm:$0xff]
        %2054 = vset.pattern.permute.xlu0 30
        %2055 = vperm.xlu0 %2054, %v1183
        %v2056 = vpop.permute.xlu0 %2055
        %2058 = vset.pattern.permute.xlu0 30
        %2059 = vperm.xlu0 %2058, %v1184
        %v2060 = vpop.permute.xlu0 %2059
        %2062 = vset.pattern.permute.xlu0 30
        %2063 = vperm.xlu0 %2062, %v1185
        %v2064 = vpop.permute.xlu0 %2063
        %2066 = vset.pattern.permute.xlu0 30
        %2067 = vperm.xlu0 %2066, %v1186
        %v2068 = vpop.permute.xlu0 %2067
        %2070 = vset.pattern.permute.xlu0 30
        %2071 = vperm.xlu0 %2070, %v1187
        %v2072 = vpop.permute.xlu0 %2071
        %2074 = vset.pattern.permute.xlu0 30
        %2075 = vperm.xlu0 %2074, %v1188
        %v2076 = vpop.permute.xlu0 %2075
        %2078 = vset.pattern.permute.xlu0 30
        %2079 = vperm.xlu0 %2078, %v1189
        %v2080 = vpop.permute.xlu0 %2079
        %2082 = vset.pattern.permute.xlu0 30
        %2083 = vperm.xlu0 %2082, %v1190
        %v2084 = vpop.permute.xlu0 %2083
        %v2086 = vmul.f32 %v2056, %v2046
        %v2087 = vmul.f32 %v2060, %v2047
        %v2088 = vmul.f32 %v2064, %v2048
        %v2089 = vmul.f32 %v2068, %v2049
        %v2090 = vmul.f32 %v2072, %v2050
        %v2091 = vmul.f32 %v2076, %v2051
        %v2092 = vmul.f32 %v2080, %v2052
        %v2093 = vmul.f32 %v2084, %v2053
        %v2094 = vadd.f32 %v2037, %v2086
        %v2095 = vadd.f32 %v2038, %v2087
        %v2096 = vadd.f32 %v2039, %v2088
        %v2097 = vadd.f32 %v2040, %v2089
        %v2098 = vadd.f32 %v2041, %v2090
        %v2099 = vadd.f32 %v2042, %v2091
        %v2100 = vadd.f32 %v2043, %v2092
        %v2101 = vadd.f32 %v2044, %v2093
        %s2102 = scalar_lea.vmem [#allocation3], 1024
        %v2103 = vld [vmem:[%s2102] sm:$0xff]
        %v2104 = vld [vmem:[%s2102 + $0x8] sm:$0xff]
        %v2105 = vld [vmem:[%s2102 + $0x10] sm:$0xff]
        %v2106 = vld [vmem:[%s2102 + $0x18] sm:$0xff]
        %v2107 = vld [vmem:[%s2102 + $0x20] sm:$0xff]
        %v2108 = vld [vmem:[%s2102 + $0x28] sm:$0xff]
        %v2109 = vld [vmem:[%s2102 + $0x30] sm:$0xff]
        %v2110 = vld [vmem:[%s2102 + $0x38] sm:$0xff]
        %2111 = vset.pattern.permute.xlu0 32
        %2112 = vperm.xlu0 %2111, %v1183
        %v2113 = vpop.permute.xlu0 %2112
        %2115 = vset.pattern.permute.xlu0 32
        %2116 = vperm.xlu0 %2115, %v1184
        %v2117 = vpop.permute.xlu0 %2116
        %2119 = vset.pattern.permute.xlu0 32
        %2120 = vperm.xlu0 %2119, %v1185
        %v2121 = vpop.permute.xlu0 %2120
        %2123 = vset.pattern.permute.xlu0 32
        %2124 = vperm.xlu0 %2123, %v1186
        %v2125 = vpop.permute.xlu0 %2124
        %2127 = vset.pattern.permute.xlu0 32
        %2128 = vperm.xlu0 %2127, %v1187
        %v2129 = vpop.permute.xlu0 %2128
        %2131 = vset.pattern.permute.xlu0 32
        %2132 = vperm.xlu0 %2131, %v1188
        %v2133 = vpop.permute.xlu0 %2132
        %2135 = vset.pattern.permute.xlu0 32
        %2136 = vperm.xlu0 %2135, %v1189
        %v2137 = vpop.permute.xlu0 %2136
        %2139 = vset.pattern.permute.xlu0 32
        %2140 = vperm.xlu0 %2139, %v1190
        %v2141 = vpop.permute.xlu0 %2140
        %v2143 = vmul.f32 %v2113, %v2103
        %v2144 = vmul.f32 %v2117, %v2104
        %v2145 = vmul.f32 %v2121, %v2105
        %v2146 = vmul.f32 %v2125, %v2106
        %v2147 = vmul.f32 %v2129, %v2107
        %v2148 = vmul.f32 %v2133, %v2108
        %v2149 = vmul.f32 %v2137, %v2109
        %v2150 = vmul.f32 %v2141, %v2110
        %v2151 = vadd.f32 %v2094, %v2143
        %v2152 = vadd.f32 %v2095, %v2144
        %v2153 = vadd.f32 %v2096, %v2145
        %v2154 = vadd.f32 %v2097, %v2146
        %v2155 = vadd.f32 %v2098, %v2147
        %v2156 = vadd.f32 %v2099, %v2148
        %v2157 = vadd.f32 %v2100, %v2149
        %v2158 = vadd.f32 %v2101, %v2150
        %s2159 = scalar_lea.vmem [#allocation3], 1088
        %v2160 = vld [vmem:[%s2159] sm:$0xff]
        %v2161 = vld [vmem:[%s2159 + $0x8] sm:$0xff]
        %v2162 = vld [vmem:[%s2159 + $0x10] sm:$0xff]
        %v2163 = vld [vmem:[%s2159 + $0x18] sm:$0xff]
        %v2164 = vld [vmem:[%s2159 + $0x20] sm:$0xff]
        %v2165 = vld [vmem:[%s2159 + $0x28] sm:$0xff]
        %v2166 = vld [vmem:[%s2159 + $0x30] sm:$0xff]
        %v2167 = vld [vmem:[%s2159 + $0x38] sm:$0xff]
        %2168 = vset.pattern.permute.xlu0 34
        %2169 = vperm.xlu0 %2168, %v1183
        %v2170 = vpop.permute.xlu0 %2169
        %2172 = vset.pattern.permute.xlu0 34
        %2173 = vperm.xlu0 %2172, %v1184
        %v2174 = vpop.permute.xlu0 %2173
        %2176 = vset.pattern.permute.xlu0 34
        %2177 = vperm.xlu0 %2176, %v1185
        %v2178 = vpop.permute.xlu0 %2177
        %2180 = vset.pattern.permute.xlu0 34
        %2181 = vperm.xlu0 %2180, %v1186
        %v2182 = vpop.permute.xlu0 %2181
        %2184 = vset.pattern.permute.xlu0 34
        %2185 = vperm.xlu0 %2184, %v1187
        %v2186 = vpop.permute.xlu0 %2185
        %2188 = vset.pattern.permute.xlu0 34
        %2189 = vperm.xlu0 %2188, %v1188
        %v2190 = vpop.permute.xlu0 %2189
        %2192 = vset.pattern.permute.xlu0 34
        %2193 = vperm.xlu0 %2192, %v1189
        %v2194 = vpop.permute.xlu0 %2193
        %2196 = vset.pattern.permute.xlu0 34
        %2197 = vperm.xlu0 %2196, %v1190
        %v2198 = vpop.permute.xlu0 %2197
        %v2200 = vmul.f32 %v2170, %v2160
        %v2201 = vmul.f32 %v2174, %v2161
        %v2202 = vmul.f32 %v2178, %v2162
        %v2203 = vmul.f32 %v2182, %v2163
        %v2204 = vmul.f32 %v2186, %v2164
        %v2205 = vmul.f32 %v2190, %v2165
        %v2206 = vmul.f32 %v2194, %v2166
        %v2207 = vmul.f32 %v2198, %v2167
        %v2208 = vadd.f32 %v2151, %v2200
        %v2209 = vadd.f32 %v2152, %v2201
        %v2210 = vadd.f32 %v2153, %v2202
        %v2211 = vadd.f32 %v2154, %v2203
        %v2212 = vadd.f32 %v2155, %v2204
        %v2213 = vadd.f32 %v2156, %v2205
        %v2214 = vadd.f32 %v2157, %v2206
        %v2215 = vadd.f32 %v2158, %v2207
        %s2216 = scalar_lea.vmem [#allocation3], 1152
        %v2217 = vld [vmem:[%s2216] sm:$0xff]
        %v2218 = vld [vmem:[%s2216 + $0x8] sm:$0xff]
        %v2219 = vld [vmem:[%s2216 + $0x10] sm:$0xff]
        %v2220 = vld [vmem:[%s2216 + $0x18] sm:$0xff]
        %v2221 = vld [vmem:[%s2216 + $0x20] sm:$0xff]
        %v2222 = vld [vmem:[%s2216 + $0x28] sm:$0xff]
        %v2223 = vld [vmem:[%s2216 + $0x30] sm:$0xff]
        %v2224 = vld [vmem:[%s2216 + $0x38] sm:$0xff]
        %2225 = vset.pattern.permute.xlu0 36
        %2226 = vperm.xlu0 %2225, %v1183
        %v2227 = vpop.permute.xlu0 %2226
        %2229 = vset.pattern.permute.xlu0 36
        %2230 = vperm.xlu0 %2229, %v1184
        %v2231 = vpop.permute.xlu0 %2230
        %2233 = vset.pattern.permute.xlu0 36
        %2234 = vperm.xlu0 %2233, %v1185
        %v2235 = vpop.permute.xlu0 %2234
        %2237 = vset.pattern.permute.xlu0 36
        %2238 = vperm.xlu0 %2237, %v1186
        %v2239 = vpop.permute.xlu0 %2238
        %2241 = vset.pattern.permute.xlu0 36
        %2242 = vperm.xlu0 %2241, %v1187
        %v2243 = vpop.permute.xlu0 %2242
        %2245 = vset.pattern.permute.xlu0 36
        %2246 = vperm.xlu0 %2245, %v1188
        %v2247 = vpop.permute.xlu0 %2246
        %2249 = vset.pattern.permute.xlu0 36
        %2250 = vperm.xlu0 %2249, %v1189
        %v2251 = vpop.permute.xlu0 %2250
        %2253 = vset.pattern.permute.xlu0 36
        %2254 = vperm.xlu0 %2253, %v1190
        %v2255 = vpop.permute.xlu0 %2254
        %v2257 = vmul.f32 %v2227, %v2217
        %v2258 = vmul.f32 %v2231, %v2218
        %v2259 = vmul.f32 %v2235, %v2219
        %v2260 = vmul.f32 %v2239, %v2220
        %v2261 = vmul.f32 %v2243, %v2221
        %v2262 = vmul.f32 %v2247, %v2222
        %v2263 = vmul.f32 %v2251, %v2223
        %v2264 = vmul.f32 %v2255, %v2224
        %v2265 = vadd.f32 %v2208, %v2257
        %v2266 = vadd.f32 %v2209, %v2258
        %v2267 = vadd.f32 %v2210, %v2259
        %v2268 = vadd.f32 %v2211, %v2260
        %v2269 = vadd.f32 %v2212, %v2261
        %v2270 = vadd.f32 %v2213, %v2262
        %v2271 = vadd.f32 %v2214, %v2263
        %v2272 = vadd.f32 %v2215, %v2264
        %s2273 = scalar_lea.vmem [#allocation3], 1216
        %v2274 = vld [vmem:[%s2273] sm:$0xff]
        %v2275 = vld [vmem:[%s2273 + $0x8] sm:$0xff]
        %v2276 = vld [vmem:[%s2273 + $0x10] sm:$0xff]
        %v2277 = vld [vmem:[%s2273 + $0x18] sm:$0xff]
        %v2278 = vld [vmem:[%s2273 + $0x20] sm:$0xff]
        %v2279 = vld [vmem:[%s2273 + $0x28] sm:$0xff]
        %v2280 = vld [vmem:[%s2273 + $0x30] sm:$0xff]
        %v2281 = vld [vmem:[%s2273 + $0x38] sm:$0xff]
        %2282 = vset.pattern.permute.xlu0 38
        %2283 = vperm.xlu0 %2282, %v1183
        %v2284 = vpop.permute.xlu0 %2283
        %2286 = vset.pattern.permute.xlu0 38
        %2287 = vperm.xlu0 %2286, %v1184
        %v2288 = vpop.permute.xlu0 %2287
        %2290 = vset.pattern.permute.xlu0 38
        %2291 = vperm.xlu0 %2290, %v1185
        %v2292 = vpop.permute.xlu0 %2291
        %2294 = vset.pattern.permute.xlu0 38
        %2295 = vperm.xlu0 %2294, %v1186
        %v2296 = vpop.permute.xlu0 %2295
        %2298 = vset.pattern.permute.xlu0 38
        %2299 = vperm.xlu0 %2298, %v1187
        %v2300 = vpop.permute.xlu0 %2299
        %2302 = vset.pattern.permute.xlu0 38
        %2303 = vperm.xlu0 %2302, %v1188
        %v2304 = vpop.permute.xlu0 %2303
        %2306 = vset.pattern.permute.xlu0 38
        %2307 = vperm.xlu0 %2306, %v1189
        %v2308 = vpop.permute.xlu0 %2307
        %2310 = vset.pattern.permute.xlu0 38
        %2311 = vperm.xlu0 %2310, %v1190
        %v2312 = vpop.permute.xlu0 %2311
        %v2314 = vmul.f32 %v2284, %v2274
        %v2315 = vmul.f32 %v2288, %v2275
        %v2316 = vmul.f32 %v2292, %v2276
        %v2317 = vmul.f32 %v2296, %v2277
        %v2318 = vmul.f32 %v2300, %v2278
        %v2319 = vmul.f32 %v2304, %v2279
        %v2320 = vmul.f32 %v2308, %v2280
        %v2321 = vmul.f32 %v2312, %v2281
        %v2322 = vadd.f32 %v2265, %v2314
        %v2323 = vadd.f32 %v2266, %v2315
        %v2324 = vadd.f32 %v2267, %v2316
        %v2325 = vadd.f32 %v2268, %v2317
        %v2326 = vadd.f32 %v2269, %v2318
        %v2327 = vadd.f32 %v2270, %v2319
        %v2328 = vadd.f32 %v2271, %v2320
        %v2329 = vadd.f32 %v2272, %v2321
        %s2330 = scalar_lea.vmem [#allocation3], 1280
        %v2331 = vld [vmem:[%s2330] sm:$0xff]
        %v2332 = vld [vmem:[%s2330 + $0x8] sm:$0xff]
        %v2333 = vld [vmem:[%s2330 + $0x10] sm:$0xff]
        %v2334 = vld [vmem:[%s2330 + $0x18] sm:$0xff]
        %v2335 = vld [vmem:[%s2330 + $0x20] sm:$0xff]
        %v2336 = vld [vmem:[%s2330 + $0x28] sm:$0xff]
        %v2337 = vld [vmem:[%s2330 + $0x30] sm:$0xff]
        %v2338 = vld [vmem:[%s2330 + $0x38] sm:$0xff]
        %2339 = vset.pattern.permute.xlu0 40
        %2340 = vperm.xlu0 %2339, %v1183
        %v2341 = vpop.permute.xlu0 %2340
        %2343 = vset.pattern.permute.xlu0 40
        %2344 = vperm.xlu0 %2343, %v1184
        %v2345 = vpop.permute.xlu0 %2344
        %2347 = vset.pattern.permute.xlu0 40
        %2348 = vperm.xlu0 %2347, %v1185
        %v2349 = vpop.permute.xlu0 %2348
        %2351 = vset.pattern.permute.xlu0 40
        %2352 = vperm.xlu0 %2351, %v1186
        %v2353 = vpop.permute.xlu0 %2352
        %2355 = vset.pattern.permute.xlu0 40
        %2356 = vperm.xlu0 %2355, %v1187
        %v2357 = vpop.permute.xlu0 %2356
        %2359 = vset.pattern.permute.xlu0 40
        %2360 = vperm.xlu0 %2359, %v1188
        %v2361 = vpop.permute.xlu0 %2360
        %2363 = vset.pattern.permute.xlu0 40
        %2364 = vperm.xlu0 %2363, %v1189
        %v2365 = vpop.permute.xlu0 %2364
        %2367 = vset.pattern.permute.xlu0 40
        %2368 = vperm.xlu0 %2367, %v1190
        %v2369 = vpop.permute.xlu0 %2368
        %v2371 = vmul.f32 %v2341, %v2331
        %v2372 = vmul.f32 %v2345, %v2332
        %v2373 = vmul.f32 %v2349, %v2333
        %v2374 = vmul.f32 %v2353, %v2334
        %v2375 = vmul.f32 %v2357, %v2335
        %v2376 = vmul.f32 %v2361, %v2336
        %v2377 = vmul.f32 %v2365, %v2337
        %v2378 = vmul.f32 %v2369, %v2338
        %v2379 = vadd.f32 %v2322, %v2371
        %v2380 = vadd.f32 %v2323, %v2372
        %v2381 = vadd.f32 %v2324, %v2373
        %v2382 = vadd.f32 %v2325, %v2374
        %v2383 = vadd.f32 %v2326, %v2375
        %v2384 = vadd.f32 %v2327, %v2376
        %v2385 = vadd.f32 %v2328, %v2377
        %v2386 = vadd.f32 %v2329, %v2378
        %s2387 = scalar_lea.vmem [#allocation3], 1344
        %v2388 = vld [vmem:[%s2387] sm:$0xff]
        %v2389 = vld [vmem:[%s2387 + $0x8] sm:$0xff]
        %v2390 = vld [vmem:[%s2387 + $0x10] sm:$0xff]
        %v2391 = vld [vmem:[%s2387 + $0x18] sm:$0xff]
        %v2392 = vld [vmem:[%s2387 + $0x20] sm:$0xff]
        %v2393 = vld [vmem:[%s2387 + $0x28] sm:$0xff]
        %v2394 = vld [vmem:[%s2387 + $0x30] sm:$0xff]
        %v2395 = vld [vmem:[%s2387 + $0x38] sm:$0xff]
        %2396 = vset.pattern.permute.xlu0 42
        %2397 = vperm.xlu0 %2396, %v1183
        %v2398 = vpop.permute.xlu0 %2397
        %2400 = vset.pattern.permute.xlu0 42
        %2401 = vperm.xlu0 %2400, %v1184
        %v2402 = vpop.permute.xlu0 %2401
        %2404 = vset.pattern.permute.xlu0 42
        %2405 = vperm.xlu0 %2404, %v1185
        %v2406 = vpop.permute.xlu0 %2405
        %2408 = vset.pattern.permute.xlu0 42
        %2409 = vperm.xlu0 %2408, %v1186
        %v2410 = vpop.permute.xlu0 %2409
        %2412 = vset.pattern.permute.xlu0 42
        %2413 = vperm.xlu0 %2412, %v1187
        %v2414 = vpop.permute.xlu0 %2413
        %2416 = vset.pattern.permute.xlu0 42
        %2417 = vperm.xlu0 %2416, %v1188
        %v2418 = vpop.permute.xlu0 %2417
        %2420 = vset.pattern.permute.xlu0 42
        %2421 = vperm.xlu0 %2420, %v1189
        %v2422 = vpop.permute.xlu0 %2421
        %2424 = vset.pattern.permute.xlu0 42
        %2425 = vperm.xlu0 %2424, %v1190
        %v2426 = vpop.permute.xlu0 %2425
        %v2428 = vmul.f32 %v2398, %v2388
        %v2429 = vmul.f32 %v2402, %v2389
        %v2430 = vmul.f32 %v2406, %v2390
        %v2431 = vmul.f32 %v2410, %v2391
        %v2432 = vmul.f32 %v2414, %v2392
        %v2433 = vmul.f32 %v2418, %v2393
        %v2434 = vmul.f32 %v2422, %v2394
        %v2435 = vmul.f32 %v2426, %v2395
        %v2436 = vadd.f32 %v2379, %v2428
        %v2437 = vadd.f32 %v2380, %v2429
        %v2438 = vadd.f32 %v2381, %v2430
        %v2439 = vadd.f32 %v2382, %v2431
        %v2440 = vadd.f32 %v2383, %v2432
        %v2441 = vadd.f32 %v2384, %v2433
        %v2442 = vadd.f32 %v2385, %v2434
        %v2443 = vadd.f32 %v2386, %v2435
        %s2444 = scalar_lea.vmem [#allocation3], 1408
        %v2445 = vld [vmem:[%s2444] sm:$0xff]
        %v2446 = vld [vmem:[%s2444 + $0x8] sm:$0xff]
        %v2447 = vld [vmem:[%s2444 + $0x10] sm:$0xff]
        %v2448 = vld [vmem:[%s2444 + $0x18] sm:$0xff]
        %v2449 = vld [vmem:[%s2444 + $0x20] sm:$0xff]
        %v2450 = vld [vmem:[%s2444 + $0x28] sm:$0xff]
        %v2451 = vld [vmem:[%s2444 + $0x30] sm:$0xff]
        %v2452 = vld [vmem:[%s2444 + $0x38] sm:$0xff]
        %2453 = vset.pattern.permute.xlu0 44
        %2454 = vperm.xlu0 %2453, %v1183
        %v2455 = vpop.permute.xlu0 %2454
        %2457 = vset.pattern.permute.xlu0 44
        %2458 = vperm.xlu0 %2457, %v1184
        %v2459 = vpop.permute.xlu0 %2458
        %2461 = vset.pattern.permute.xlu0 44
        %2462 = vperm.xlu0 %2461, %v1185
        %v2463 = vpop.permute.xlu0 %2462
        %2465 = vset.pattern.permute.xlu0 44
        %2466 = vperm.xlu0 %2465, %v1186
        %v2467 = vpop.permute.xlu0 %2466
        %2469 = vset.pattern.permute.xlu0 44
        %2470 = vperm.xlu0 %2469, %v1187
        %v2471 = vpop.permute.xlu0 %2470
        %2473 = vset.pattern.permute.xlu0 44
        %2474 = vperm.xlu0 %2473, %v1188
        %v2475 = vpop.permute.xlu0 %2474
        %2477 = vset.pattern.permute.xlu0 44
        %2478 = vperm.xlu0 %2477, %v1189
        %v2479 = vpop.permute.xlu0 %2478
        %2481 = vset.pattern.permute.xlu0 44
        %2482 = vperm.xlu0 %2481, %v1190
        %v2483 = vpop.permute.xlu0 %2482
        %v2485 = vmul.f32 %v2455, %v2445
        %v2486 = vmul.f32 %v2459, %v2446
        %v2487 = vmul.f32 %v2463, %v2447
        %v2488 = vmul.f32 %v2467, %v2448
        %v2489 = vmul.f32 %v2471, %v2449
        %v2490 = vmul.f32 %v2475, %v2450
        %v2491 = vmul.f32 %v2479, %v2451
        %v2492 = vmul.f32 %v2483, %v2452
        %v2493 = vadd.f32 %v2436, %v2485
        %v2494 = vadd.f32 %v2437, %v2486
        %v2495 = vadd.f32 %v2438, %v2487
        %v2496 = vadd.f32 %v2439, %v2488
        %v2497 = vadd.f32 %v2440, %v2489
        %v2498 = vadd.f32 %v2441, %v2490
        %v2499 = vadd.f32 %v2442, %v2491
        %v2500 = vadd.f32 %v2443, %v2492
        %s2501 = scalar_lea.vmem [#allocation3], 1472
        %v2502 = vld [vmem:[%s2501] sm:$0xff]
        %v2503 = vld [vmem:[%s2501 + $0x8] sm:$0xff]
        %v2504 = vld [vmem:[%s2501 + $0x10] sm:$0xff]
        %v2505 = vld [vmem:[%s2501 + $0x18] sm:$0xff]
        %v2506 = vld [vmem:[%s2501 + $0x20] sm:$0xff]
        %v2507 = vld [vmem:[%s2501 + $0x28] sm:$0xff]
        %v2508 = vld [vmem:[%s2501 + $0x30] sm:$0xff]
        %v2509 = vld [vmem:[%s2501 + $0x38] sm:$0xff]
        %2510 = vset.pattern.permute.xlu0 46
        %2511 = vperm.xlu0 %2510, %v1183
        %v2512 = vpop.permute.xlu0 %2511
        %2514 = vset.pattern.permute.xlu0 46
        %2515 = vperm.xlu0 %2514, %v1184
        %v2516 = vpop.permute.xlu0 %2515
        %2518 = vset.pattern.permute.xlu0 46
        %2519 = vperm.xlu0 %2518, %v1185
        %v2520 = vpop.permute.xlu0 %2519
        %2522 = vset.pattern.permute.xlu0 46
        %2523 = vperm.xlu0 %2522, %v1186
        %v2524 = vpop.permute.xlu0 %2523
        %2526 = vset.pattern.permute.xlu0 46
        %2527 = vperm.xlu0 %2526, %v1187
        %v2528 = vpop.permute.xlu0 %2527
        %2530 = vset.pattern.permute.xlu0 46
        %2531 = vperm.xlu0 %2530, %v1188
        %v2532 = vpop.permute.xlu0 %2531
        %2534 = vset.pattern.permute.xlu0 46
        %2535 = vperm.xlu0 %2534, %v1189
        %v2536 = vpop.permute.xlu0 %2535
        %2538 = vset.pattern.permute.xlu0 46
        %2539 = vperm.xlu0 %2538, %v1190
        %v2540 = vpop.permute.xlu0 %2539
        %v2542 = vmul.f32 %v2512, %v2502
        %v2543 = vmul.f32 %v2516, %v2503
        %v2544 = vmul.f32 %v2520, %v2504
        %v2545 = vmul.f32 %v2524, %v2505
        %v2546 = vmul.f32 %v2528, %v2506
        %v2547 = vmul.f32 %v2532, %v2507
        %v2548 = vmul.f32 %v2536, %v2508
        %v2549 = vmul.f32 %v2540, %v2509
        %v2550 = vadd.f32 %v2493, %v2542
        %v2551 = vadd.f32 %v2494, %v2543
        %v2552 = vadd.f32 %v2495, %v2544
        %v2553 = vadd.f32 %v2496, %v2545
        %v2554 = vadd.f32 %v2497, %v2546
        %v2555 = vadd.f32 %v2498, %v2547
        %v2556 = vadd.f32 %v2499, %v2548
        %v2557 = vadd.f32 %v2500, %v2549
        %v2558 = vadd.f32 %v2550, %v2551
        %v2559 = vadd.f32 %v2558, %v2552
        %v2560 = vadd.f32 %v2559, %v2553
        %v2561 = vadd.f32 %v2560, %v2554
        %v2562 = vadd.f32 %v2561, %v2555
        %v2563 = vadd.f32 %v2562, %v2556
        %v2564 = vadd.f32 %v2563, %v2557
        %v2565 = vrot.slane %v2564, 4
        %v2566 = vadd.f32 %v2564, %v2565
        %v2567 = vrot.slane %v2566, 2
        %v2568 = vadd.f32 %v2566, %v2567
        %v2569 = vrot.slane %v2568, 1
        %v2570 = vadd.f32 %v2568, %v2569
        %v2571 = vld [vmem:[%s6] sm:$0x1]
        %v2572 = vadd.f32 %v2570, %v2571
        %v2573 = vmax.f32 %v2572, 0.0
        %v2574 = vld [vmem:[%s7] sm:$0x1]
        %v2575 = vmul.f32 %v2573, %v2574
        %vm2576 = vcmask 1040384
        %v2577 = vsel %vm2576, %v2575, 0.0
        %2578 = vadd.xlane.f32.xlu0 %v2577
        %v2579 = vpop.xlane.xlu0 %2578
        %v2580 = vld [vmem:[#allocation2] sm:$0x1]
        %v2581 = vadd.f32 %v2579, %v2580
        %v2582 = vsub.f32 0.0, %v2581
        %v2583 = vmul.f32 %v2582, 1.442695
        %v2584 = vpow.pop %v2583
        %v2585 = vadd.f32 %v2584, 1.0
        %v2586 = vrcp.pop %v2585
        %v2587 = vmul.f32 1.0, %v2586
        %vm2588 = vcmask 0
        %2589 = vst.msk [vmem:[%s345] sm:$0x1] %vm2588, %v2587
        %p2590 = scmp.lt.s32.totalorder %s23, 1
        %s2591 = scalar_select %p2590, %s23, 1
        %s2592 = scalar_lea.vmem %s9, %s2591
        // Predicated region
        $region61: #{wake_word_forward.1} parent=55 // pred_check
          %p2593 = pneg %p235
        $region62: #{wake_word_forward.1} parent=55 // pred_check_branch
          %2595 = sbr.rel (%p2593) target = $region64
        $region63: #{wake_word_forward.1} parent=55 // pred_region
          _
        $region64: #{wake_word_forward.1} parent=55 // pred_fallthru
          _
      $region56: #{wake_word_forward.1} parent=5 // pred_fallthru
        _
      %p2596 = scmp.le.s32.totalorder 2, %s18
      // Predicated region
      $region65: #{wake_word_forward.1} parent=5 // pred_check
        %p2597 = pneg %p2596
      $region66: #{wake_word_forward.1} parent=5 // pred_check_branch
        %2599 = sbr.rel (%p2597) target = $region68
      $region67: #{wake_word_forward.1} parent=5 // pred_region
        %s2600 = ssub.s32 %s18, 2
        // Predicated region
        $region69: #{wake_word_forward.1} parent=67 // pred_check
          %p2601 = pneg %p241
        $region70: #{wake_word_forward.1} parent=67 // pred_check_branch
          %2603 = sbr.rel (%p2601) target = $region72
        $region71: #{wake_word_forward.1} parent=67 // pred_region
          %p2604 = scmp.lt.s32.totalorder %s24, 1
          %s2605 = scalar_select %p2604, %s24, 1
          %s2606 = scalar_lea.vmem %s9, %s2605
        $region72: #{wake_word_forward.1} parent=67 // pred_fallthru
          _
      $region68: #{wake_word_forward.1} parent=5 // pred_fallthru
        _
    $region6: #{wake_word_forward.1} parent=1 // loop_footer
      %s22 = sadd.s32 1, %s18
    $region7: #{wake_word_forward.1} parent=1 // loop_footer_branch
      %17 = sbr.rel target = $region3
    $region8: #{wake_word_forward.1} parent=1 // loop_exit
      _
    %2607 = vsyncpa [#allocation4], 1
    %s2608 = scalar_lea.sflag [#allocation4], 1
    %2609 = vsyncpa %s2608, 1

</llo_original>
